<compile_context>
chip_gen: v6e
topology: v6e:2x2x1
jax: 0.10.0
libtpu: 0.0.40
codegen_flags: <defaults>
</compile_context>

<pallas_src>
import functools

import jax
import jax.numpy as jnp
from jax.experimental import pallas as pl
from jax.experimental.pallas import tpu as pltpu


def lstm_autoencoder_kernel(
    x2d_ref,      # (T*B, F)   bf16  time-major flattened input
    wih_e_ref,    # (F, 4H)    bf16  encoder LSTM  W_ih^T   (gate order i,f,g,o)
    whh_e_ref,    # (H, 4H)    bf16  encoder LSTM  W_hh^T
    be_ref,       # (1, 4H)    f32   encoder LSTM  b_ih + b_hh
    wih_d_ref,    # (H, 4F)    bf16  decoder LSTMCell W_ih^T (used only at t=0)
    bd_ref,       # (1, 4F)    f32   decoder LSTMCell b_ih + b_hh
    wdec_ref,     # (F, 4F)    f32   folded decoder weight: wlin^T@wih_d^T + whh_d^T
    bdec_ref,     # (1, 4F)    f32   folded decoder bias:   blin@wih_d^T + bd
    out_ref,      # (T*B, F)   f32   reconstruction, time-major flattened
    *,
    seq_len,
    batch,
):
    T, B = seq_len, batch
    F = x2d_ref.shape[1]
    H = whh_e_ref.shape[0]

    whh_e = whh_e_ref[...]          # bf16, resident for the whole recurrence
    wih_d = wih_d_ref[...]          # bf16
    wdec = wdec_ref[...]            # f32 (consumed by the VPU, not the MXU)

    # ---- Encoder input projection hoisted out of the recurrence ------------
    # One bulk (T*B, F)bf16 @ (F, 4H)bf16 -> f32 matmul, bias folded in once.
    x_proj = (
        jnp.dot(x2d_ref[...], wih_e_ref[...], preferred_element_type=jnp.float32)
        + be_ref[...]
    )                                                   # (T*B, 4H) f32

    def gates(pre, n):
        # sigmoid(x) = 0.5*tanh(0.5*x) + 0.5 -> a single EUP op covers the
        # three sigmoid gates; one more tanh for the candidate gate.
        s = 0.5 * jnp.tanh(0.5 * pre) + 0.5
        tg = jnp.tanh(pre)
        return (s[:, 0:n], s[:, n:2 * n], tg[:, 2 * n:3 * n], s[:, 3 * n:4 * n])

    # ---- Encoder recurrence: one bf16 MXU matmul per step -------------------
    h = jnp.zeros((B, H), jnp.float32)
    c = jnp.zeros((B, H), jnp.float32)
    for t in range(T):
        pre = x_proj[t * B:(t + 1) * B, :] + jnp.dot(
            h.astype(jnp.bfloat16), whh_e, preferred_element_type=jnp.float32)
        i, f, g, o = gates(pre, H)
        c = f * c + i * g
        h = o * jnp.tanh(c)

    # ---- Decoder step t = 0: LSTMCell(h_enc) with zero (h, c) ---------------
    # h0 = c0 = 0, so the W_hh @ h0 term is exactly zero and f * c0 == 0.
    pre0 = jnp.dot(h.astype(jnp.bfloat16), wih_d,
                   preferred_element_type=jnp.float32) + bd_ref[...]
    i, f, g, o = gates(pre0, F)
    cd = i * g
    hd = o * jnp.tanh(cd)
    out_ref[0:B, :] = hd                                 # static-index store

    # ---- Decoder steps t >= 1: K = F (= 4) contraction on the VPU -----------
    # Folded weight is tiny; an unrolled broadcast-FMA chain beats the MXU
    # push -> fill -> pop latency on every serial step.
    b_dec = jnp.broadcast_to(bdec_ref[...], (B, 4 * F))  # hoisted broadcast
    wdec_rows = [wdec[k:k + 1, :] for k in range(F)]     # hoisted static slices
    for t in range(1, T):
        pre = b_dec
        for k in range(F):
            pre = pre + hd[:, k:k + 1] * wdec_rows[k]    # (B,1)*(1,4F) FMA
        i, f, g, o = gates(pre, F)
        cd = f * cd + i * g
        hd = o * jnp.tanh(cd)
        row = (T - t) * B                                # predict_backward=True
        out_ref[row:row + B, :] = hd                     # static-index store


def lstm_autoencoder(x, params):
    T, B, F = x.shape

    # Algebraic fold of the decoder Linear into the recurrent weight,
    # performed in f32 in the wrapper (outside the kernel):
    #   pre = (h @ wlin^T + blin) @ wih_d^T + h @ whh_d^T + bd
    #       = h @ (wlin^T @ wih_d^T + whh_d^T) + (blin @ wih_d^T + bd)
    wdec = params["wlin_T"] @ params["wih_d_T"] + params["whh_d_T"]   # (F, 4F) f32
    bdec = params["blin"] @ params["wih_d_T"] + params["bd"]          # (1, 4F) f32

    # Wrapper-side layout plumbing + one-time bf16 casts of the MXU operands.
    x2d = x.reshape(T * B, F).astype(jnp.bfloat16)
    wih_e = params["wih_e_T"].astype(jnp.bfloat16)
    whh_e = params["whh_e_T"].astype(jnp.bfloat16)
    wih_d = params["wih_d_T"].astype(jnp.bfloat16)

    vmem = lambda: pl.BlockSpec(memory_space=pltpu.MemorySpace.VMEM)
    kernel = functools.partial(lstm_autoencoder_kernel, seq_len=T, batch=B)
    out2d = pl.pallas_call(
        kernel,
        out_shape=jax.ShapeDtypeStruct((T * B, F), jnp.float32),
        in_specs=[vmem() for _ in range(8)],
        out_specs=vmem(),
    )(
        x2d,
        wih_e, whh_e, params["be"],
        wih_d, params["bd"],
        wdec, bdec,
    )
    return out2d.reshape(T, B, F)


# -------------------------- plain-JAX reference ------------------------------
# Unfused f32 math matching the PyTorch module op-for-op, so the algebraic
# folds and bf16 MXU operands in the kernel are verified against the original
# formulation.
def reference(x, p):
    T, B, F = x.shape
    H = p["whh_e_T"].shape[0]

    def gts(pre, n):
        return (jax.nn.sigmoid(pre[:, 0:n]), jax.nn.sigmoid(pre[:, n:2 * n]),
                jnp.tanh(pre[:, 2 * n:3 * n]), jax.nn.sigmoid(pre[:, 3 * n:4 * n]))

    h = jnp.zeros((B, H), jnp.float32)
    c = jnp.zeros((B, H), jnp.float32)
    for t in range(T):
        pre = x[t] @ p["wih_e_T"] + h @ p["whh_e_T"] + p["be"]
        i, f, g, o = gts(pre, H)
        c = f * c + i * g
        h = o * jnp.tanh(c)

    def cell(inp, hh, cc):
        pre = inp @ p["wih_d_T"] + hh @ p["whh_d_T"] + p["bd"]
        i, f, g, o = gts(pre, F)
        cc = f * cc + i * g
        hh = o * jnp.tanh(cc)
        return hh, cc

    x_hat = [None] * T
    hd, cd = cell(h, jnp.zeros((B, F), jnp.float32), jnp.zeros((B, F), jnp.float32))
    x_hat[0] = hd
    for t in range(1, T):
        inp = hd @ p["wlin_T"] + p["blin"]
        hd, cd = cell(inp, hd, cd)
        x_hat[T - t] = hd
    return jnp.stack(x_hat, axis=0)


def init_params(key, n_features, hidden_size):
    F, H = n_features, hidden_size
    ks = jax.random.split(key, 10)
    ke = 1.0 / jnp.sqrt(H)
    kd = 1.0 / jnp.sqrt(F)
    u = lambda k, shape, s: jax.random.uniform(k, shape, jnp.float32, -s, s)
    return {
        # encoder nn.LSTM(F -> H): weight_ih (4H,F), weight_hh (4H,H), biases (4H,)
        "wih_e_T": u(ks[0], (F, 4 * H), ke),
        "whh_e_T": u(ks[1], (H, 4 * H), ke),
        "be": u(ks[2], (1, 4 * H), ke) + u(ks[3], (1, 4 * H), ke),
        # decoder nn.LSTMCell(H -> F)
        "wih_d_T": u(ks[4], (H, 4 * F), kd),
        "whh_d_T": u(ks[5], (F, 4 * F), kd),
        "bd": u(ks[6], (1, 4 * F), kd) + u(ks[7], (1, 4 * F), kd),
        # decoder nn.Linear(F -> H)
        "wlin_T": u(ks[8], (F, H), kd),
        "blin": u(ks[9], (1, H), kd),
    }


if __name__ == "__main__":
    seq_len, batch, n_features, hidden_size = 8, 2, 4, 32
    key = jax.random.PRNGKey(0)
    kx, kp = jax.random.split(key)
    x = jax.random.normal(kx, (seq_len, batch, n_features), jnp.float32)
    params = init_params(kp, n_features, hidden_size)

    out = lstm_autoencoder(x, params)
    out = jax.block_until_ready(out)

    ref = reference(x, params)
    assert out.shape == (seq_len, batch, n_features)
    # Tolerance accounts for bf16 MXU operands (kernel) vs full-f32 reference
    # accumulated over the 2T-step recurrence.
    assert bool(jnp.allclose(out, ref, atol=5e-2, rtol=5e-2)), "mismatch vs reference"
    print("KERNEL_OK")
</pallas_src>

<mosaic_0001>
module attributes {stable_mosaic.version = 11 : i64} {
  func.func @lstm_autoencoder_kernel(%arg0: memref<16x4xbf16, #tpu.memory_space<vmem>>, %arg1: memref<4x128xbf16, #tpu.memory_space<vmem>>, %arg2: memref<32x128xbf16, #tpu.memory_space<vmem>>, %arg3: memref<1x128xf32, #tpu.memory_space<vmem>>, %arg4: memref<32x16xbf16, #tpu.memory_space<vmem>>, %arg5: memref<1x16xf32, #tpu.memory_space<vmem>>, %arg6: memref<4x16xf32, #tpu.memory_space<vmem>>, %arg7: memref<1x16xf32, #tpu.memory_space<vmem>>, %arg8: memref<16x4xf32, #tpu.memory_space<vmem>>) attributes {dimension_semantics = [], scalar_prefetch = 0 : i64, scratch_operands = 0 : i64, tpu.core_type = #tpu.core_type<tc>} {
    %c0 = arith.constant 0 : index
    %c0_0 = arith.constant 0 : index
    %0 = vector.load %arg2[%c0, %c0_0] : memref<32x128xbf16, #tpu.memory_space<vmem>>, vector<32x128xbf16>
    %c0_1 = arith.constant 0 : index
    %c0_2 = arith.constant 0 : index
    %1 = vector.load %arg4[%c0_1, %c0_2] : memref<32x16xbf16, #tpu.memory_space<vmem>>, vector<32x16xbf16>
    %c0_3 = arith.constant 0 : index
    %c0_4 = arith.constant 0 : index
    %2 = vector.load %arg6[%c0_3, %c0_4] : memref<4x16xf32, #tpu.memory_space<vmem>>, vector<4x16xf32>
    %c0_5 = arith.constant 0 : index
    %c0_6 = arith.constant 0 : index
    %3 = vector.load %arg0[%c0_5, %c0_6] : memref<16x4xbf16, #tpu.memory_space<vmem>>, vector<16x4xbf16>
    %c0_7 = arith.constant 0 : index
    %c0_8 = arith.constant 0 : index
    %4 = vector.load %arg1[%c0_7, %c0_8] : memref<4x128xbf16, #tpu.memory_space<vmem>>, vector<4x128xbf16>
    %cst = arith.constant dense<0.000000e+00> : vector<16x128xf32>
    %5 = tpu.matmul %3, %4, %cst {dimension_numbers = #tpu.dot_dimension_numbers<[1], [0], [0], [1], [0, 0, 1, 1], [], []>} : vector<16x4xbf16>, vector<4x128xbf16>, vector<16x128xf32> -> vector<16x128xf32>
    %c0_9 = arith.constant 0 : index
    %c0_10 = arith.constant 0 : index
    %6 = vector.load %arg3[%c0_9, %c0_10] : memref<1x128xf32, #tpu.memory_space<vmem>>, vector<1x128xf32>
    %7 = vector.broadcast %6 : vector<1x128xf32> to vector<16x128xf32>
    %8 = arith.addf %5, %7 : vector<16x128xf32>
    %cst_11 = arith.constant 0.000000e+00 : f32
    %9 = vector.broadcast %cst_11 : f32 to vector<2x32xf32>
    %cst_12 = arith.constant 0.000000e+00 : f32
    %10 = vector.broadcast %cst_12 : f32 to vector<2x32xf32>
    %11 = vector.extract_strided_slice %8 {offsets = [0, 0], sizes = [2, 128], strides = [1, 1]} : vector<16x128xf32> to vector<2x128xf32>
    %12 = arith.truncf %9 : vector<2x32xf32> to vector<2x32xbf16>
    %cst_13 = arith.constant dense<0.000000e+00> : vector<2x128xf32>
    %13 = tpu.matmul %12, %0, %cst_13 {dimension_numbers = #tpu.dot_dimension_numbers<[1], [0], [0], [1], [0, 0, 1, 1], [], []>} : vector<2x32xbf16>, vector<32x128xbf16>, vector<2x128xf32> -> vector<2x128xf32>
    %14 = arith.addf %11, %13 : vector<2x128xf32>
    %cst_14 = arith.constant 5.000000e-01 : f32
    %15 = vector.broadcast %cst_14 : f32 to vector<2x128xf32>
    %16 = arith.mulf %15, %14 : vector<2x128xf32>
    %17 = math.tanh %16 : vector<2x128xf32>
    %cst_15 = arith.constant 5.000000e-01 : f32
    %18 = vector.broadcast %cst_15 : f32 to vector<2x128xf32>
    %19 = arith.mulf %18, %17 : vector<2x128xf32>
    %cst_16 = arith.constant 5.000000e-01 : f32
    %20 = vector.broadcast %cst_16 : f32 to vector<2x128xf32>
    %21 = arith.addf %19, %20 : vector<2x128xf32>
    %22 = math.tanh %14 : vector<2x128xf32>
    %23 = vector.extract_strided_slice %21 {offsets = [0, 0], sizes = [2, 32], strides = [1, 1]} : vector<2x128xf32> to vector<2x32xf32>
    %24 = vector.extract_strided_slice %21 {offsets = [0, 32], sizes = [2, 32], strides = [1, 1]} : vector<2x128xf32> to vector<2x32xf32>
    %25 = vector.extract_strided_slice %22 {offsets = [0, 64], sizes = [2, 32], strides = [1, 1]} : vector<2x128xf32> to vector<2x32xf32>
    %26 = vector.extract_strided_slice %21 {offsets = [0, 96], sizes = [2, 32], strides = [1, 1]} : vector<2x128xf32> to vector<2x32xf32>
    %27 = arith.mulf %24, %10 : vector<2x32xf32>
    %28 = arith.mulf %23, %25 : vector<2x32xf32>
    %29 = arith.addf %27, %28 : vector<2x32xf32>
    %30 = math.tanh %29 : vector<2x32xf32>
    %31 = arith.mulf %26, %30 : vector<2x32xf32>
    %32 = vector.extract_strided_slice %8 {offsets = [2, 0], sizes = [2, 128], strides = [1, 1]} : vector<16x128xf32> to vector<2x128xf32>
    %33 = arith.truncf %31 : vector<2x32xf32> to vector<2x32xbf16>
    %cst_17 = arith.constant dense<0.000000e+00> : vector<2x128xf32>
    %34 = tpu.matmul %33, %0, %cst_17 {dimension_numbers = #tpu.dot_dimension_numbers<[1], [0], [0], [1], [0, 0, 1, 1], [], []>} : vector<2x32xbf16>, vector<32x128xbf16>, vector<2x128xf32> -> vector<2x128xf32>
    %35 = arith.addf %32, %34 : vector<2x128xf32>
    %cst_18 = arith.constant 5.000000e-01 : f32
    %36 = vector.broadcast %cst_18 : f32 to vector<2x128xf32>
    %37 = arith.mulf %36, %35 : vector<2x128xf32>
    %38 = math.tanh %37 : vector<2x128xf32>
    %cst_19 = arith.constant 5.000000e-01 : f32
    %39 = vector.broadcast %cst_19 : f32 to vector<2x128xf32>
    %40 = arith.mulf %39, %38 : vector<2x128xf32>
    %cst_20 = arith.constant 5.000000e-01 : f32
    %41 = vector.broadcast %cst_20 : f32 to vector<2x128xf32>
    %42 = arith.addf %40, %41 : vector<2x128xf32>
    %43 = math.tanh %35 : vector<2x128xf32>
    %44 = vector.extract_strided_slice %42 {offsets = [0, 0], sizes = [2, 32], strides = [1, 1]} : vector<2x128xf32> to vector<2x32xf32>
    %45 = vector.extract_strided_slice %42 {offsets = [0, 32], sizes = [2, 32], strides = [1, 1]} : vector<2x128xf32> to vector<2x32xf32>
    %46 = vector.extract_strided_slice %43 {offsets = [0, 64], sizes = [2, 32], strides = [1, 1]} : vector<2x128xf32> to vector<2x32xf32>
    %47 = vector.extract_strided_slice %42 {offsets = [0, 96], sizes = [2, 32], strides = [1, 1]} : vector<2x128xf32> to vector<2x32xf32>
    %48 = arith.mulf %45, %29 : vector<2x32xf32>
    %49 = arith.mulf %44, %46 : vector<2x32xf32>
    %50 = arith.addf %48, %49 : vector<2x32xf32>
    %51 = math.tanh %50 : vector<2x32xf32>
    %52 = arith.mulf %47, %51 : vector<2x32xf32>
    %53 = vector.extract_strided_slice %8 {offsets = [4, 0], sizes = [2, 128], strides = [1, 1]} : vector<16x128xf32> to vector<2x128xf32>
    %54 = arith.truncf %52 : vector<2x32xf32> to vector<2x32xbf16>
    %cst_21 = arith.constant dense<0.000000e+00> : vector<2x128xf32>
    %55 = tpu.matmul %54, %0, %cst_21 {dimension_numbers = #tpu.dot_dimension_numbers<[1], [0], [0], [1], [0, 0, 1, 1], [], []>} : vector<2x32xbf16>, vector<32x128xbf16>, vector<2x128xf32> -> vector<2x128xf32>
    %56 = arith.addf %53, %55 : vector<2x128xf32>
    %cst_22 = arith.constant 5.000000e-01 : f32
    %57 = vector.broadcast %cst_22 : f32 to vector<2x128xf32>
    %58 = arith.mulf %57, %56 : vector<2x128xf32>
    %59 = math.tanh %58 : vector<2x128xf32>
    %cst_23 = arith.constant 5.000000e-01 : f32
    %60 = vector.broadcast %cst_23 : f32 to vector<2x128xf32>
    %61 = arith.mulf %60, %59 : vector<2x128xf32>
    %cst_24 = arith.constant 5.000000e-01 : f32
    %62 = vector.broadcast %cst_24 : f32 to vector<2x128xf32>
    %63 = arith.addf %61, %62 : vector<2x128xf32>
    %64 = math.tanh %56 : vector<2x128xf32>
    %65 = vector.extract_strided_slice %63 {offsets = [0, 0], sizes = [2, 32], strides = [1, 1]} : vector<2x128xf32> to vector<2x32xf32>
    %66 = vector.extract_strided_slice %63 {offsets = [0, 32], sizes = [2, 32], strides = [1, 1]} : vector<2x128xf32> to vector<2x32xf32>
    %67 = vector.extract_strided_slice %64 {offsets = [0, 64], sizes = [2, 32], strides = [1, 1]} : vector<2x128xf32> to vector<2x32xf32>
    %68 = vector.extract_strided_slice %63 {offsets = [0, 96], sizes = [2, 32], strides = [1, 1]} : vector<2x128xf32> to vector<2x32xf32>
    %69 = arith.mulf %66, %50 : vector<2x32xf32>
    %70 = arith.mulf %65, %67 : vector<2x32xf32>
    %71 = arith.addf %69, %70 : vector<2x32xf32>
    %72 = math.tanh %71 : vector<2x32xf32>
    %73 = arith.mulf %68, %72 : vector<2x32xf32>
    %74 = vector.extract_strided_slice %8 {offsets = [6, 0], sizes = [2, 128], strides = [1, 1]} : vector<16x128xf32> to vector<2x128xf32>
    %75 = arith.truncf %73 : vector<2x32xf32> to vector<2x32xbf16>
    %cst_25 = arith.constant dense<0.000000e+00> : vector<2x128xf32>
    %76 = tpu.matmul %75, %0, %cst_25 {dimension_numbers = #tpu.dot_dimension_numbers<[1], [0], [0], [1], [0, 0, 1, 1], [], []>} : vector<2x32xbf16>, vector<32x128xbf16>, vector<2x128xf32> -> vector<2x128xf32>
    %77 = arith.addf %74, %76 : vector<2x128xf32>
    %cst_26 = arith.constant 5.000000e-01 : f32
    %78 = vector.broadcast %cst_26 : f32 to vector<2x128xf32>
    %79 = arith.mulf %78, %77 : vector<2x128xf32>
    %80 = math.tanh %79 : vector<2x128xf32>
    %cst_27 = arith.constant 5.000000e-01 : f32
    %81 = vector.broadcast %cst_27 : f32 to vector<2x128xf32>
    %82 = arith.mulf %81, %80 : vector<2x128xf32>
    %cst_28 = arith.constant 5.000000e-01 : f32
    %83 = vector.broadcast %cst_28 : f32 to vector<2x128xf32>
    %84 = arith.addf %82, %83 : vector<2x128xf32>
    %85 = math.tanh %77 : vector<2x128xf32>
    %86 = vector.extract_strided_slice %84 {offsets = [0, 0], sizes = [2, 32], strides = [1, 1]} : vector<2x128xf32> to vector<2x32xf32>
    %87 = vector.extract_strided_slice %84 {offsets = [0, 32], sizes = [2, 32], strides = [1, 1]} : vector<2x128xf32> to vector<2x32xf32>
    %88 = vector.extract_strided_slice %85 {offsets = [0, 64], sizes = [2, 32], strides = [1, 1]} : vector<2x128xf32> to vector<2x32xf32>
    %89 = vector.extract_strided_slice %84 {offsets = [0, 96], sizes = [2, 32], strides = [1, 1]} : vector<2x128xf32> to vector<2x32xf32>
    %90 = arith.mulf %87, %71 : vector<2x32xf32>
    %91 = arith.mulf %86, %88 : vector<2x32xf32>
    %92 = arith.addf %90, %91 : vector<2x32xf32>
    %93 = math.tanh %92 : vector<2x32xf32>
    %94 = arith.mulf %89, %93 : vector<2x32xf32>
    %95 = vector.extract_strided_slice %8 {offsets = [8, 0], sizes = [2, 128], strides = [1, 1]} : vector<16x128xf32> to vector<2x128xf32>
    %96 = arith.truncf %94 : vector<2x32xf32> to vector<2x32xbf16>
    %cst_29 = arith.constant dense<0.000000e+00> : vector<2x128xf32>
    %97 = tpu.matmul %96, %0, %cst_29 {dimension_numbers = #tpu.dot_dimension_numbers<[1], [0], [0], [1], [0, 0, 1, 1], [], []>} : vector<2x32xbf16>, vector<32x128xbf16>, vector<2x128xf32> -> vector<2x128xf32>
    %98 = arith.addf %95, %97 : vector<2x128xf32>
    %cst_30 = arith.constant 5.000000e-01 : f32
    %99 = vector.broadcast %cst_30 : f32 to vector<2x128xf32>
    %100 = arith.mulf %99, %98 : vector<2x128xf32>
    %101 = math.tanh %100 : vector<2x128xf32>
    %cst_31 = arith.constant 5.000000e-01 : f32
    %102 = vector.broadcast %cst_31 : f32 to vector<2x128xf32>
    %103 = arith.mulf %102, %101 : vector<2x128xf32>
    %cst_32 = arith.constant 5.000000e-01 : f32
    %104 = vector.broadcast %cst_32 : f32 to vector<2x128xf32>
    %105 = arith.addf %103, %104 : vector<2x128xf32>
    %106 = math.tanh %98 : vector<2x128xf32>
    %107 = vector.extract_strided_slice %105 {offsets = [0, 0], sizes = [2, 32], strides = [1, 1]} : vector<2x128xf32> to vector<2x32xf32>
    %108 = vector.extract_strided_slice %105 {offsets = [0, 32], sizes = [2, 32], strides = [1, 1]} : vector<2x128xf32> to vector<2x32xf32>
    %109 = vector.extract_strided_slice %106 {offsets = [0, 64], sizes = [2, 32], strides = [1, 1]} : vector<2x128xf32> to vector<2x32xf32>
    %110 = vector.extract_strided_slice %105 {offsets = [0, 96], sizes = [2, 32], strides = [1, 1]} : vector<2x128xf32> to vector<2x32xf32>
    %111 = arith.mulf %108, %92 : vector<2x32xf32>
    %112 = arith.mulf %107, %109 : vector<2x32xf32>
    %113 = arith.addf %111, %112 : vector<2x32xf32>
    %114 = math.tanh %113 : vector<2x32xf32>
    %115 = arith.mulf %110, %114 : vector<2x32xf32>
    %116 = vector.extract_strided_slice %8 {offsets = [10, 0], sizes = [2, 128], strides = [1, 1]} : vector<16x128xf32> to vector<2x128xf32>
    %117 = arith.truncf %115 : vector<2x32xf32> to vector<2x32xbf16>
    %cst_33 = arith.constant dense<0.000000e+00> : vector<2x128xf32>
    %118 = tpu.matmul %117, %0, %cst_33 {dimension_numbers = #tpu.dot_dimension_numbers<[1], [0], [0], [1], [0, 0, 1, 1], [], []>} : vector<2x32xbf16>, vector<32x128xbf16>, vector<2x128xf32> -> vector<2x128xf32>
    %119 = arith.addf %116, %118 : vector<2x128xf32>
    %cst_34 = arith.constant 5.000000e-01 : f32
    %120 = vector.broadcast %cst_34 : f32 to vector<2x128xf32>
    %121 = arith.mulf %120, %119 : vector<2x128xf32>
    %122 = math.tanh %121 : vector<2x128xf32>
    %cst_35 = arith.constant 5.000000e-01 : f32
    %123 = vector.broadcast %cst_35 : f32 to vector<2x128xf32>
    %124 = arith.mulf %123, %122 : vector<2x128xf32>
    %cst_36 = arith.constant 5.000000e-01 : f32
    %125 = vector.broadcast %cst_36 : f32 to vector<2x128xf32>
    %126 = arith.addf %124, %125 : vector<2x128xf32>
    %127 = math.tanh %119 : vector<2x128xf32>
    %128 = vector.extract_strided_slice %126 {offsets = [0, 0], sizes = [2, 32], strides = [1, 1]} : vector<2x128xf32> to vector<2x32xf32>
    %129 = vector.extract_strided_slice %126 {offsets = [0, 32], sizes = [2, 32], strides = [1, 1]} : vector<2x128xf32> to vector<2x32xf32>
    %130 = vector.extract_strided_slice %127 {offsets = [0, 64], sizes = [2, 32], strides = [1, 1]} : vector<2x128xf32> to vector<2x32xf32>
    %131 = vector.extract_strided_slice %126 {offsets = [0, 96], sizes = [2, 32], strides = [1, 1]} : vector<2x128xf32> to vector<2x32xf32>
    %132 = arith.mulf %129, %113 : vector<2x32xf32>
    %133 = arith.mulf %128, %130 : vector<2x32xf32>
    %134 = arith.addf %132, %133 : vector<2x32xf32>
    %135 = math.tanh %134 : vector<2x32xf32>
    %136 = arith.mulf %131, %135 : vector<2x32xf32>
    %137 = vector.extract_strided_slice %8 {offsets = [12, 0], sizes = [2, 128], strides = [1, 1]} : vector<16x128xf32> to vector<2x128xf32>
    %138 = arith.truncf %136 : vector<2x32xf32> to vector<2x32xbf16>
    %cst_37 = arith.constant dense<0.000000e+00> : vector<2x128xf32>
    %139 = tpu.matmul %138, %0, %cst_37 {dimension_numbers = #tpu.dot_dimension_numbers<[1], [0], [0], [1], [0, 0, 1, 1], [], []>} : vector<2x32xbf16>, vector<32x128xbf16>, vector<2x128xf32> -> vector<2x128xf32>
    %140 = arith.addf %137, %139 : vector<2x128xf32>
    %cst_38 = arith.constant 5.000000e-01 : f32
    %141 = vector.broadcast %cst_38 : f32 to vector<2x128xf32>
    %142 = arith.mulf %141, %140 : vector<2x128xf32>
    %143 = math.tanh %142 : vector<2x128xf32>
    %cst_39 = arith.constant 5.000000e-01 : f32
    %144 = vector.broadcast %cst_39 : f32 to vector<2x128xf32>
    %145 = arith.mulf %144, %143 : vector<2x128xf32>
    %cst_40 = arith.constant 5.000000e-01 : f32
    %146 = vector.broadcast %cst_40 : f32 to vector<2x128xf32>
    %147 = arith.addf %145, %146 : vector<2x128xf32>
    %148 = math.tanh %140 : vector<2x128xf32>
    %149 = vector.extract_strided_slice %147 {offsets = [0, 0], sizes = [2, 32], strides = [1, 1]} : vector<2x128xf32> to vector<2x32xf32>
    %150 = vector.extract_strided_slice %147 {offsets = [0, 32], sizes = [2, 32], strides = [1, 1]} : vector<2x128xf32> to vector<2x32xf32>
    %151 = vector.extract_strided_slice %148 {offsets = [0, 64], sizes = [2, 32], strides = [1, 1]} : vector<2x128xf32> to vector<2x32xf32>
    %152 = vector.extract_strided_slice %147 {offsets = [0, 96], sizes = [2, 32], strides = [1, 1]} : vector<2x128xf32> to vector<2x32xf32>
    %153 = arith.mulf %150, %134 : vector<2x32xf32>
    %154 = arith.mulf %149, %151 : vector<2x32xf32>
    %155 = arith.addf %153, %154 : vector<2x32xf32>
    %156 = math.tanh %155 : vector<2x32xf32>
    %157 = arith.mulf %152, %156 : vector<2x32xf32>
    %158 = vector.extract_strided_slice %8 {offsets = [14, 0], sizes = [2, 128], strides = [1, 1]} : vector<16x128xf32> to vector<2x128xf32>
    %159 = arith.truncf %157 : vector<2x32xf32> to vector<2x32xbf16>
    %cst_41 = arith.constant dense<0.000000e+00> : vector<2x128xf32>
    %160 = tpu.matmul %159, %0, %cst_41 {dimension_numbers = #tpu.dot_dimension_numbers<[1], [0], [0], [1], [0, 0, 1, 1], [], []>} : vector<2x32xbf16>, vector<32x128xbf16>, vector<2x128xf32> -> vector<2x128xf32>
    %161 = arith.addf %158, %160 : vector<2x128xf32>
    %cst_42 = arith.constant 5.000000e-01 : f32
    %162 = vector.broadcast %cst_42 : f32 to vector<2x128xf32>
    %163 = arith.mulf %162, %161 : vector<2x128xf32>
    %164 = math.tanh %163 : vector<2x128xf32>
    %cst_43 = arith.constant 5.000000e-01 : f32
    %165 = vector.broadcast %cst_43 : f32 to vector<2x128xf32>
    %166 = arith.mulf %165, %164 : vector<2x128xf32>
    %cst_44 = arith.constant 5.000000e-01 : f32
    %167 = vector.broadcast %cst_44 : f32 to vector<2x128xf32>
    %168 = arith.addf %166, %167 : vector<2x128xf32>
    %169 = math.tanh %161 : vector<2x128xf32>
    %170 = vector.extract_strided_slice %168 {offsets = [0, 0], sizes = [2, 32], strides = [1, 1]} : vector<2x128xf32> to vector<2x32xf32>
    %171 = vector.extract_strided_slice %168 {offsets = [0, 32], sizes = [2, 32], strides = [1, 1]} : vector<2x128xf32> to vector<2x32xf32>
    %172 = vector.extract_strided_slice %169 {offsets = [0, 64], sizes = [2, 32], strides = [1, 1]} : vector<2x128xf32> to vector<2x32xf32>
    %173 = vector.extract_strided_slice %168 {offsets = [0, 96], sizes = [2, 32], strides = [1, 1]} : vector<2x128xf32> to vector<2x32xf32>
    %174 = arith.mulf %171, %155 : vector<2x32xf32>
    %175 = arith.mulf %170, %172 : vector<2x32xf32>
    %176 = arith.addf %174, %175 : vector<2x32xf32>
    %177 = math.tanh %176 : vector<2x32xf32>
    %178 = arith.mulf %173, %177 : vector<2x32xf32>
    %179 = arith.truncf %178 : vector<2x32xf32> to vector<2x32xbf16>
    %cst_45 = arith.constant dense<0.000000e+00> : vector<2x16xf32>
    %180 = tpu.matmul %179, %1, %cst_45 {dimension_numbers = #tpu.dot_dimension_numbers<[1], [0], [0], [1], [0, 0, 1, 1], [], []>} : vector<2x32xbf16>, vector<32x16xbf16>, vector<2x16xf32> -> vector<2x16xf32>
    %c0_46 = arith.constant 0 : index
    %c0_47 = arith.constant 0 : index
    %181 = vector.load %arg5[%c0_46, %c0_47] : memref<1x16xf32, #tpu.memory_space<vmem>>, vector<1x16xf32>
    %182 = vector.broadcast %181 : vector<1x16xf32> to vector<2x16xf32>
    %183 = arith.addf %180, %182 : vector<2x16xf32>
    %cst_48 = arith.constant 5.000000e-01 : f32
    %184 = vector.broadcast %cst_48 : f32 to vector<2x16xf32>
    %185 = arith.mulf %184, %183 : vector<2x16xf32>
    %186 = math.tanh %185 : vector<2x16xf32>
    %cst_49 = arith.constant 5.000000e-01 : f32
    %187 = vector.broadcast %cst_49 : f32 to vector<2x16xf32>
    %188 = arith.mulf %187, %186 : vector<2x16xf32>
    %cst_50 = arith.constant 5.000000e-01 : f32
    %189 = vector.broadcast %cst_50 : f32 to vector<2x16xf32>
    %190 = arith.addf %188, %189 : vector<2x16xf32>
    %191 = math.tanh %183 : vector<2x16xf32>
    %192 = vector.extract_strided_slice %190 {offsets = [0, 0], sizes = [2, 4], strides = [1, 1]} : vector<2x16xf32> to vector<2x4xf32>
    %193 = vector.extract_strided_slice %191 {offsets = [0, 8], sizes = [2, 4], strides = [1, 1]} : vector<2x16xf32> to vector<2x4xf32>
    %194 = vector.extract_strided_slice %190 {offsets = [0, 12], sizes = [2, 4], strides = [1, 1]} : vector<2x16xf32> to vector<2x4xf32>
    %195 = arith.mulf %192, %193 : vector<2x4xf32>
    %196 = math.tanh %195 : vector<2x4xf32>
    %197 = arith.mulf %194, %196 : vector<2x4xf32>
    %c0_51 = arith.constant 0 : index
    %c0_52 = arith.constant 0 : index
    %198 = vector.load %arg8[%c0_51, %c0_52] : memref<16x4xf32, #tpu.memory_space<vmem>>, vector<2x4xf32>
    tpu.vector_store %arg8[%c0_51, %c0_52], %197 {strides = array<i32>} : memref<16x4xf32, #tpu.memory_space<vmem>>, vector<2x4xf32>,
    %c0_53 = arith.constant 0 : index
    %c0_54 = arith.constant 0 : index
    %199 = vector.load %arg7[%c0_53, %c0_54] : memref<1x16xf32, #tpu.memory_space<vmem>>, vector<1x16xf32>
    %200 = vector.shape_cast %199 : vector<1x16xf32> to vector<1x16xf32>
    %201 = vector.broadcast %200 : vector<1x16xf32> to vector<2x16xf32>
    %202 = vector.extract_strided_slice %2 {offsets = [0, 0], sizes = [1, 16], strides = [1, 1]} : vector<4x16xf32> to vector<1x16xf32>
    %203 = vector.extract_strided_slice %2 {offsets = [1, 0], sizes = [1, 16], strides = [1, 1]} : vector<4x16xf32> to vector<1x16xf32>
    %204 = vector.extract_strided_slice %2 {offsets = [2, 0], sizes = [1, 16], strides = [1, 1]} : vector<4x16xf32> to vector<1x16xf32>
    %205 = vector.extract_strided_slice %2 {offsets = [3, 0], sizes = [1, 16], strides = [1, 1]} : vector<4x16xf32> to vector<1x16xf32>
    %206 = vector.extract_strided_slice %197 {offsets = [0, 0], sizes = [2, 1], strides = [1, 1]} : vector<2x4xf32> to vector<2x1xf32>
    %207 = vector.broadcast %206 : vector<2x1xf32> to vector<2x16xf32>
    %208 = vector.broadcast %202 : vector<1x16xf32> to vector<2x16xf32>
    %209 = arith.mulf %207, %208 : vector<2x16xf32>
    %210 = arith.addf %201, %209 : vector<2x16xf32>
    %211 = vector.extract_strided_slice %197 {offsets = [0, 1], sizes = [2, 1], strides = [1, 1]} : vector<2x4xf32> to vector<2x1xf32>
    %212 = vector.broadcast %211 : vector<2x1xf32> to vector<2x16xf32>
    %213 = vector.broadcast %203 : vector<1x16xf32> to vector<2x16xf32>
    %214 = arith.mulf %212, %213 : vector<2x16xf32>
    %215 = arith.addf %210, %214 : vector<2x16xf32>
    %216 = vector.extract_strided_slice %197 {offsets = [0, 2], sizes = [2, 1], strides = [1, 1]} : vector<2x4xf32> to vector<2x1xf32>
    %217 = vector.broadcast %216 : vector<2x1xf32> to vector<2x16xf32>
    %218 = vector.broadcast %204 : vector<1x16xf32> to vector<2x16xf32>
    %219 = arith.mulf %217, %218 : vector<2x16xf32>
    %220 = arith.addf %215, %219 : vector<2x16xf32>
    %221 = vector.extract_strided_slice %197 {offsets = [0, 3], sizes = [2, 1], strides = [1, 1]} : vector<2x4xf32> to vector<2x1xf32>
    %222 = vector.broadcast %221 : vector<2x1xf32> to vector<2x16xf32>
    %223 = vector.broadcast %205 : vector<1x16xf32> to vector<2x16xf32>
    %224 = arith.mulf %222, %223 : vector<2x16xf32>
    %225 = arith.addf %220, %224 : vector<2x16xf32>
    %cst_55 = arith.constant 5.000000e-01 : f32
    %226 = vector.broadcast %cst_55 : f32 to vector<2x16xf32>
    %227 = arith.mulf %226, %225 : vector<2x16xf32>
    %228 = math.tanh %227 : vector<2x16xf32>
    %cst_56 = arith.constant 5.000000e-01 : f32
    %229 = vector.broadcast %cst_56 : f32 to vector<2x16xf32>
    %230 = arith.mulf %229, %228 : vector<2x16xf32>
    %cst_57 = arith.constant 5.000000e-01 : f32
    %231 = vector.broadcast %cst_57 : f32 to vector<2x16xf32>
    %232 = arith.addf %230, %231 : vector<2x16xf32>
    %233 = math.tanh %225 : vector<2x16xf32>
    %234 = vector.extract_strided_slice %232 {offsets = [0, 0], sizes = [2, 4], strides = [1, 1]} : vector<2x16xf32> to vector<2x4xf32>
    %235 = vector.extract_strided_slice %232 {offsets = [0, 4], sizes = [2, 4], strides = [1, 1]} : vector<2x16xf32> to vector<2x4xf32>
    %236 = vector.extract_strided_slice %233 {offsets = [0, 8], sizes = [2, 4], strides = [1, 1]} : vector<2x16xf32> to vector<2x4xf32>
    %237 = vector.extract_strided_slice %232 {offsets = [0, 12], sizes = [2, 4], strides = [1, 1]} : vector<2x16xf32> to vector<2x4xf32>
    %238 = arith.mulf %235, %195 : vector<2x4xf32>
    %239 = arith.mulf %234, %236 : vector<2x4xf32>
    %240 = arith.addf %238, %239 : vector<2x4xf32>
    %241 = math.tanh %240 : vector<2x4xf32>
    %242 = arith.mulf %237, %241 : vector<2x4xf32>
    %c14 = arith.constant 14 : index
    %c0_58 = arith.constant 0 : index
    %243 = vector.load %arg8[%c14, %c0_58] : memref<16x4xf32, #tpu.memory_space<vmem>>, vector<2x4xf32>
    tpu.vector_store %arg8[%c14, %c0_58], %242 {strides = array<i32>} : memref<16x4xf32, #tpu.memory_space<vmem>>, vector<2x4xf32>,
    %244 = vector.extract_strided_slice %242 {offsets = [0, 0], sizes = [2, 1], strides = [1, 1]} : vector<2x4xf32> to vector<2x1xf32>
    %245 = vector.broadcast %244 : vector<2x1xf32> to vector<2x16xf32>
    %246 = vector.broadcast %202 : vector<1x16xf32> to vector<2x16xf32>
    %247 = arith.mulf %245, %246 : vector<2x16xf32>
    %248 = arith.addf %201, %247 : vector<2x16xf32>
    %249 = vector.extract_strided_slice %242 {offsets = [0, 1], sizes = [2, 1], strides = [1, 1]} : vector<2x4xf32> to vector<2x1xf32>
    %250 = vector.broadcast %249 : vector<2x1xf32> to vector<2x16xf32>
    %251 = vector.broadcast %203 : vector<1x16xf32> to vector<2x16xf32>
    %252 = arith.mulf %250, %251 : vector<2x16xf32>
    %253 = arith.addf %248, %252 : vector<2x16xf32>
    %254 = vector.extract_strided_slice %242 {offsets = [0, 2], sizes = [2, 1], strides = [1, 1]} : vector<2x4xf32> to vector<2x1xf32>
    %255 = vector.broadcast %254 : vector<2x1xf32> to vector<2x16xf32>
    %256 = vector.broadcast %204 : vector<1x16xf32> to vector<2x16xf32>
    %257 = arith.mulf %255, %256 : vector<2x16xf32>
    %258 = arith.addf %253, %257 : vector<2x16xf32>
    %259 = vector.extract_strided_slice %242 {offsets = [0, 3], sizes = [2, 1], strides = [1, 1]} : vector<2x4xf32> to vector<2x1xf32>
    %260 = vector.broadcast %259 : vector<2x1xf32> to vector<2x16xf32>
    %261 = vector.broadcast %205 : vector<1x16xf32> to vector<2x16xf32>
    %262 = arith.mulf %260, %261 : vector<2x16xf32>
    %263 = arith.addf %258, %262 : vector<2x16xf32>
    %cst_59 = arith.constant 5.000000e-01 : f32
    %264 = vector.broadcast %cst_59 : f32 to vector<2x16xf32>
    %265 = arith.mulf %264, %263 : vector<2x16xf32>
    %266 = math.tanh %265 : vector<2x16xf32>
    %cst_60 = arith.constant 5.000000e-01 : f32
    %267 = vector.broadcast %cst_60 : f32 to vector<2x16xf32>
    %268 = arith.mulf %267, %266 : vector<2x16xf32>
    %cst_61 = arith.constant 5.000000e-01 : f32
    %269 = vector.broadcast %cst_61 : f32 to vector<2x16xf32>
    %270 = arith.addf %268, %269 : vector<2x16xf32>
    %271 = math.tanh %263 : vector<2x16xf32>
    %272 = vector.extract_strided_slice %270 {offsets = [0, 0], sizes = [2, 4], strides = [1, 1]} : vector<2x16xf32> to vector<2x4xf32>
    %273 = vector.extract_strided_slice %270 {offsets = [0, 4], sizes = [2, 4], strides = [1, 1]} : vector<2x16xf32> to vector<2x4xf32>
    %274 = vector.extract_strided_slice %271 {offsets = [0, 8], sizes = [2, 4], strides = [1, 1]} : vector<2x16xf32> to vector<2x4xf32>
    %275 = vector.extract_strided_slice %270 {offsets = [0, 12], sizes = [2, 4], strides = [1, 1]} : vector<2x16xf32> to vector<2x4xf32>
    %276 = arith.mulf %273, %240 : vector<2x4xf32>
    %277 = arith.mulf %272, %274 : vector<2x4xf32>
    %278 = arith.addf %276, %277 : vector<2x4xf32>
    %279 = math.tanh %278 : vector<2x4xf32>
    %280 = arith.mulf %275, %279 : vector<2x4xf32>
    %c12 = arith.constant 12 : index
    %c0_62 = arith.constant 0 : index
    %281 = vector.load %arg8[%c12, %c0_62] : memref<16x4xf32, #tpu.memory_space<vmem>>, vector<2x4xf32>
    tpu.vector_store %arg8[%c12, %c0_62], %280 {strides = array<i32>} : memref<16x4xf32, #tpu.memory_space<vmem>>, vector<2x4xf32>,
    %282 = vector.extract_strided_slice %280 {offsets = [0, 0], sizes = [2, 1], strides = [1, 1]} : vector<2x4xf32> to vector<2x1xf32>
    %283 = vector.broadcast %282 : vector<2x1xf32> to vector<2x16xf32>
    %284 = vector.broadcast %202 : vector<1x16xf32> to vector<2x16xf32>
    %285 = arith.mulf %283, %284 : vector<2x16xf32>
    %286 = arith.addf %201, %285 : vector<2x16xf32>
    %287 = vector.extract_strided_slice %280 {offsets = [0, 1], sizes = [2, 1], strides = [1, 1]} : vector<2x4xf32> to vector<2x1xf32>
    %288 = vector.broadcast %287 : vector<2x1xf32> to vector<2x16xf32>
    %289 = vector.broadcast %203 : vector<1x16xf32> to vector<2x16xf32>
    %290 = arith.mulf %288, %289 : vector<2x16xf32>
    %291 = arith.addf %286, %290 : vector<2x16xf32>
    %292 = vector.extract_strided_slice %280 {offsets = [0, 2], sizes = [2, 1], strides = [1, 1]} : vector<2x4xf32> to vector<2x1xf32>
    %293 = vector.broadcast %292 : vector<2x1xf32> to vector<2x16xf32>
    %294 = vector.broadcast %204 : vector<1x16xf32> to vector<2x16xf32>
    %295 = arith.mulf %293, %294 : vector<2x16xf32>
    %296 = arith.addf %291, %295 : vector<2x16xf32>
    %297 = vector.extract_strided_slice %280 {offsets = [0, 3], sizes = [2, 1], strides = [1, 1]} : vector<2x4xf32> to vector<2x1xf32>
    %298 = vector.broadcast %297 : vector<2x1xf32> to vector<2x16xf32>
    %299 = vector.broadcast %205 : vector<1x16xf32> to vector<2x16xf32>
    %300 = arith.mulf %298, %299 : vector<2x16xf32>
    %301 = arith.addf %296, %300 : vector<2x16xf32>
    %cst_63 = arith.constant 5.000000e-01 : f32
    %302 = vector.broadcast %cst_63 : f32 to vector<2x16xf32>
    %303 = arith.mulf %302, %301 : vector<2x16xf32>
    %304 = math.tanh %303 : vector<2x16xf32>
    %cst_64 = arith.constant 5.000000e-01 : f32
    %305 = vector.broadcast %cst_64 : f32 to vector<2x16xf32>
    %306 = arith.mulf %305, %304 : vector<2x16xf32>
    %cst_65 = arith.constant 5.000000e-01 : f32
    %307 = vector.broadcast %cst_65 : f32 to vector<2x16xf32>
    %308 = arith.addf %306, %307 : vector<2x16xf32>
    %309 = math.tanh %301 : vector<2x16xf32>
    %310 = vector.extract_strided_slice %308 {offsets = [0, 0], sizes = [2, 4], strides = [1, 1]} : vector<2x16xf32> to vector<2x4xf32>
    %311 = vector.extract_strided_slice %308 {offsets = [0, 4], sizes = [2, 4], strides = [1, 1]} : vector<2x16xf32> to vector<2x4xf32>
    %312 = vector.extract_strided_slice %309 {offsets = [0, 8], sizes = [2, 4], strides = [1, 1]} : vector<2x16xf32> to vector<2x4xf32>
    %313 = vector.extract_strided_slice %308 {offsets = [0, 12], sizes = [2, 4], strides = [1, 1]} : vector<2x16xf32> to vector<2x4xf32>
    %314 = arith.mulf %311, %278 : vector<2x4xf32>
    %315 = arith.mulf %310, %312 : vector<2x4xf32>
    %316 = arith.addf %314, %315 : vector<2x4xf32>
    %317 = math.tanh %316 : vector<2x4xf32>
    %318 = arith.mulf %313, %317 : vector<2x4xf32>
    %c10 = arith.constant 10 : index
    %c0_66 = arith.constant 0 : index
    %319 = vector.load %arg8[%c10, %c0_66] : memref<16x4xf32, #tpu.memory_space<vmem>>, vector<2x4xf32>
    tpu.vector_store %arg8[%c10, %c0_66], %318 {strides = array<i32>} : memref<16x4xf32, #tpu.memory_space<vmem>>, vector<2x4xf32>,
    %320 = vector.extract_strided_slice %318 {offsets = [0, 0], sizes = [2, 1], strides = [1, 1]} : vector<2x4xf32> to vector<2x1xf32>
    %321 = vector.broadcast %320 : vector<2x1xf32> to vector<2x16xf32>
    %322 = vector.broadcast %202 : vector<1x16xf32> to vector<2x16xf32>
    %323 = arith.mulf %321, %322 : vector<2x16xf32>
    %324 = arith.addf %201, %323 : vector<2x16xf32>
    %325 = vector.extract_strided_slice %318 {offsets = [0, 1], sizes = [2, 1], strides = [1, 1]} : vector<2x4xf32> to vector<2x1xf32>
    %326 = vector.broadcast %325 : vector<2x1xf32> to vector<2x16xf32>
    %327 = vector.broadcast %203 : vector<1x16xf32> to vector<2x16xf32>
    %328 = arith.mulf %326, %327 : vector<2x16xf32>
    %329 = arith.addf %324, %328 : vector<2x16xf32>
    %330 = vector.extract_strided_slice %318 {offsets = [0, 2], sizes = [2, 1], strides = [1, 1]} : vector<2x4xf32> to vector<2x1xf32>
    %331 = vector.broadcast %330 : vector<2x1xf32> to vector<2x16xf32>
    %332 = vector.broadcast %204 : vector<1x16xf32> to vector<2x16xf32>
    %333 = arith.mulf %331, %332 : vector<2x16xf32>
    %334 = arith.addf %329, %333 : vector<2x16xf32>
    %335 = vector.extract_strided_slice %318 {offsets = [0, 3], sizes = [2, 1], strides = [1, 1]} : vector<2x4xf32> to vector<2x1xf32>
    %336 = vector.broadcast %335 : vector<2x1xf32> to vector<2x16xf32>
    %337 = vector.broadcast %205 : vector<1x16xf32> to vector<2x16xf32>
    %338 = arith.mulf %336, %337 : vector<2x16xf32>
    %339 = arith.addf %334, %338 : vector<2x16xf32>
    %cst_67 = arith.constant 5.000000e-01 : f32
    %340 = vector.broadcast %cst_67 : f32 to vector<2x16xf32>
    %341 = arith.mulf %340, %339 : vector<2x16xf32>
    %342 = math.tanh %341 : vector<2x16xf32>
    %cst_68 = arith.constant 5.000000e-01 : f32
    %343 = vector.broadcast %cst_68 : f32 to vector<2x16xf32>
    %344 = arith.mulf %343, %342 : vector<2x16xf32>
    %cst_69 = arith.constant 5.000000e-01 : f32
    %345 = vector.broadcast %cst_69 : f32 to vector<2x16xf32>
    %346 = arith.addf %344, %345 : vector<2x16xf32>
    %347 = math.tanh %339 : vector<2x16xf32>
    %348 = vector.extract_strided_slice %346 {offsets = [0, 0], sizes = [2, 4], strides = [1, 1]} : vector<2x16xf32> to vector<2x4xf32>
    %349 = vector.extract_strided_slice %346 {offsets = [0, 4], sizes = [2, 4], strides = [1, 1]} : vector<2x16xf32> to vector<2x4xf32>
    %350 = vector.extract_strided_slice %347 {offsets = [0, 8], sizes = [2, 4], strides = [1, 1]} : vector<2x16xf32> to vector<2x4xf32>
    %351 = vector.extract_strided_slice %346 {offsets = [0, 12], sizes = [2, 4], strides = [1, 1]} : vector<2x16xf32> to vector<2x4xf32>
    %352 = arith.mulf %349, %316 : vector<2x4xf32>
    %353 = arith.mulf %348, %350 : vector<2x4xf32>
    %354 = arith.addf %352, %353 : vector<2x4xf32>
    %355 = math.tanh %354 : vector<2x4xf32>
    %356 = arith.mulf %351, %355 : vector<2x4xf32>
    %c8 = arith.constant 8 : index
    %c0_70 = arith.constant 0 : index
    %357 = vector.load %arg8[%c8, %c0_70] : memref<16x4xf32, #tpu.memory_space<vmem>>, vector<2x4xf32>
    tpu.vector_store %arg8[%c8, %c0_70], %356 {strides = array<i32>} : memref<16x4xf32, #tpu.memory_space<vmem>>, vector<2x4xf32>,
    %358 = vector.extract_strided_slice %356 {offsets = [0, 0], sizes = [2, 1], strides = [1, 1]} : vector<2x4xf32> to vector<2x1xf32>
    %359 = vector.broadcast %358 : vector<2x1xf32> to vector<2x16xf32>
    %360 = vector.broadcast %202 : vector<1x16xf32> to vector<2x16xf32>
    %361 = arith.mulf %359, %360 : vector<2x16xf32>
    %362 = arith.addf %201, %361 : vector<2x16xf32>
    %363 = vector.extract_strided_slice %356 {offsets = [0, 1], sizes = [2, 1], strides = [1, 1]} : vector<2x4xf32> to vector<2x1xf32>
    %364 = vector.broadcast %363 : vector<2x1xf32> to vector<2x16xf32>
    %365 = vector.broadcast %203 : vector<1x16xf32> to vector<2x16xf32>
    %366 = arith.mulf %364, %365 : vector<2x16xf32>
    %367 = arith.addf %362, %366 : vector<2x16xf32>
    %368 = vector.extract_strided_slice %356 {offsets = [0, 2], sizes = [2, 1], strides = [1, 1]} : vector<2x4xf32> to vector<2x1xf32>
    %369 = vector.broadcast %368 : vector<2x1xf32> to vector<2x16xf32>
    %370 = vector.broadcast %204 : vector<1x16xf32> to vector<2x16xf32>
    %371 = arith.mulf %369, %370 : vector<2x16xf32>
    %372 = arith.addf %367, %371 : vector<2x16xf32>
    %373 = vector.extract_strided_slice %356 {offsets = [0, 3], sizes = [2, 1], strides = [1, 1]} : vector<2x4xf32> to vector<2x1xf32>
    %374 = vector.broadcast %373 : vector<2x1xf32> to vector<2x16xf32>
    %375 = vector.broadcast %205 : vector<1x16xf32> to vector<2x16xf32>
    %376 = arith.mulf %374, %375 : vector<2x16xf32>
    %377 = arith.addf %372, %376 : vector<2x16xf32>
    %cst_71 = arith.constant 5.000000e-01 : f32
    %378 = vector.broadcast %cst_71 : f32 to vector<2x16xf32>
    %379 = arith.mulf %378, %377 : vector<2x16xf32>
    %380 = math.tanh %379 : vector<2x16xf32>
    %cst_72 = arith.constant 5.000000e-01 : f32
    %381 = vector.broadcast %cst_72 : f32 to vector<2x16xf32>
    %382 = arith.mulf %381, %380 : vector<2x16xf32>
    %cst_73 = arith.constant 5.000000e-01 : f32
    %383 = vector.broadcast %cst_73 : f32 to vector<2x16xf32>
    %384 = arith.addf %382, %383 : vector<2x16xf32>
    %385 = math.tanh %377 : vector<2x16xf32>
    %386 = vector.extract_strided_slice %384 {offsets = [0, 0], sizes = [2, 4], strides = [1, 1]} : vector<2x16xf32> to vector<2x4xf32>
    %387 = vector.extract_strided_slice %384 {offsets = [0, 4], sizes = [2, 4], strides = [1, 1]} : vector<2x16xf32> to vector<2x4xf32>
    %388 = vector.extract_strided_slice %385 {offsets = [0, 8], sizes = [2, 4], strides = [1, 1]} : vector<2x16xf32> to vector<2x4xf32>
    %389 = vector.extract_strided_slice %384 {offsets = [0, 12], sizes = [2, 4], strides = [1, 1]} : vector<2x16xf32> to vector<2x4xf32>
    %390 = arith.mulf %387, %354 : vector<2x4xf32>
    %391 = arith.mulf %386, %388 : vector<2x4xf32>
    %392 = arith.addf %390, %391 : vector<2x4xf32>
    %393 = math.tanh %392 : vector<2x4xf32>
    %394 = arith.mulf %389, %393 : vector<2x4xf32>
    %c6 = arith.constant 6 : index
    %c0_74 = arith.constant 0 : index
    %395 = vector.load %arg8[%c6, %c0_74] : memref<16x4xf32, #tpu.memory_space<vmem>>, vector<2x4xf32>
    tpu.vector_store %arg8[%c6, %c0_74], %394 {strides = array<i32>} : memref<16x4xf32, #tpu.memory_space<vmem>>, vector<2x4xf32>,
    %396 = vector.extract_strided_slice %394 {offsets = [0, 0], sizes = [2, 1], strides = [1, 1]} : vector<2x4xf32> to vector<2x1xf32>
    %397 = vector.broadcast %396 : vector<2x1xf32> to vector<2x16xf32>
    %398 = vector.broadcast %202 : vector<1x16xf32> to vector<2x16xf32>
    %399 = arith.mulf %397, %398 : vector<2x16xf32>
    %400 = arith.addf %201, %399 : vector<2x16xf32>
    %401 = vector.extract_strided_slice %394 {offsets = [0, 1], sizes = [2, 1], strides = [1, 1]} : vector<2x4xf32> to vector<2x1xf32>
    %402 = vector.broadcast %401 : vector<2x1xf32> to vector<2x16xf32>
    %403 = vector.broadcast %203 : vector<1x16xf32> to vector<2x16xf32>
    %404 = arith.mulf %402, %403 : vector<2x16xf32>
    %405 = arith.addf %400, %404 : vector<2x16xf32>
    %406 = vector.extract_strided_slice %394 {offsets = [0, 2], sizes = [2, 1], strides = [1, 1]} : vector<2x4xf32> to vector<2x1xf32>
    %407 = vector.broadcast %406 : vector<2x1xf32> to vector<2x16xf32>
    %408 = vector.broadcast %204 : vector<1x16xf32> to vector<2x16xf32>
    %409 = arith.mulf %407, %408 : vector<2x16xf32>
    %410 = arith.addf %405, %409 : vector<2x16xf32>
    %411 = vector.extract_strided_slice %394 {offsets = [0, 3], sizes = [2, 1], strides = [1, 1]} : vector<2x4xf32> to vector<2x1xf32>
    %412 = vector.broadcast %411 : vector<2x1xf32> to vector<2x16xf32>
    %413 = vector.broadcast %205 : vector<1x16xf32> to vector<2x16xf32>
    %414 = arith.mulf %412, %413 : vector<2x16xf32>
    %415 = arith.addf %410, %414 : vector<2x16xf32>
    %cst_75 = arith.constant 5.000000e-01 : f32
    %416 = vector.broadcast %cst_75 : f32 to vector<2x16xf32>
    %417 = arith.mulf %416, %415 : vector<2x16xf32>
    %418 = math.tanh %417 : vector<2x16xf32>
    %cst_76 = arith.constant 5.000000e-01 : f32
    %419 = vector.broadcast %cst_76 : f32 to vector<2x16xf32>
    %420 = arith.mulf %419, %418 : vector<2x16xf32>
    %cst_77 = arith.constant 5.000000e-01 : f32
    %421 = vector.broadcast %cst_77 : f32 to vector<2x16xf32>
    %422 = arith.addf %420, %421 : vector<2x16xf32>
    %423 = math.tanh %415 : vector<2x16xf32>
    %424 = vector.extract_strided_slice %422 {offsets = [0, 0], sizes = [2, 4], strides = [1, 1]} : vector<2x16xf32> to vector<2x4xf32>
    %425 = vector.extract_strided_slice %422 {offsets = [0, 4], sizes = [2, 4], strides = [1, 1]} : vector<2x16xf32> to vector<2x4xf32>
    %426 = vector.extract_strided_slice %423 {offsets = [0, 8], sizes = [2, 4], strides = [1, 1]} : vector<2x16xf32> to vector<2x4xf32>
    %427 = vector.extract_strided_slice %422 {offsets = [0, 12], sizes = [2, 4], strides = [1, 1]} : vector<2x16xf32> to vector<2x4xf32>
    %428 = arith.mulf %425, %392 : vector<2x4xf32>
    %429 = arith.mulf %424, %426 : vector<2x4xf32>
    %430 = arith.addf %428, %429 : vector<2x4xf32>
    %431 = math.tanh %430 : vector<2x4xf32>
    %432 = arith.mulf %427, %431 : vector<2x4xf32>
    %c4 = arith.constant 4 : index
    %c0_78 = arith.constant 0 : index
    %433 = vector.load %arg8[%c4, %c0_78] : memref<16x4xf32, #tpu.memory_space<vmem>>, vector<2x4xf32>
    tpu.vector_store %arg8[%c4, %c0_78], %432 {strides = array<i32>} : memref<16x4xf32, #tpu.memory_space<vmem>>, vector<2x4xf32>,
    %434 = vector.extract_strided_slice %432 {offsets = [0, 0], sizes = [2, 1], strides = [1, 1]} : vector<2x4xf32> to vector<2x1xf32>
    %435 = vector.broadcast %434 : vector<2x1xf32> to vector<2x16xf32>
    %436 = vector.broadcast %202 : vector<1x16xf32> to vector<2x16xf32>
    %437 = arith.mulf %435, %436 : vector<2x16xf32>
    %438 = arith.addf %201, %437 : vector<2x16xf32>
    %439 = vector.extract_strided_slice %432 {offsets = [0, 1], sizes = [2, 1], strides = [1, 1]} : vector<2x4xf32> to vector<2x1xf32>
    %440 = vector.broadcast %439 : vector<2x1xf32> to vector<2x16xf32>
    %441 = vector.broadcast %203 : vector<1x16xf32> to vector<2x16xf32>
    %442 = arith.mulf %440, %441 : vector<2x16xf32>
    %443 = arith.addf %438, %442 : vector<2x16xf32>
    %444 = vector.extract_strided_slice %432 {offsets = [0, 2], sizes = [2, 1], strides = [1, 1]} : vector<2x4xf32> to vector<2x1xf32>
    %445 = vector.broadcast %444 : vector<2x1xf32> to vector<2x16xf32>
    %446 = vector.broadcast %204 : vector<1x16xf32> to vector<2x16xf32>
    %447 = arith.mulf %445, %446 : vector<2x16xf32>
    %448 = arith.addf %443, %447 : vector<2x16xf32>
    %449 = vector.extract_strided_slice %432 {offsets = [0, 3], sizes = [2, 1], strides = [1, 1]} : vector<2x4xf32> to vector<2x1xf32>
    %450 = vector.broadcast %449 : vector<2x1xf32> to vector<2x16xf32>
    %451 = vector.broadcast %205 : vector<1x16xf32> to vector<2x16xf32>
    %452 = arith.mulf %450, %451 : vector<2x16xf32>
    %453 = arith.addf %448, %452 : vector<2x16xf32>
    %cst_79 = arith.constant 5.000000e-01 : f32
    %454 = vector.broadcast %cst_79 : f32 to vector<2x16xf32>
    %455 = arith.mulf %454, %453 : vector<2x16xf32>
    %456 = math.tanh %455 : vector<2x16xf32>
    %cst_80 = arith.constant 5.000000e-01 : f32
    %457 = vector.broadcast %cst_80 : f32 to vector<2x16xf32>
    %458 = arith.mulf %457, %456 : vector<2x16xf32>
    %cst_81 = arith.constant 5.000000e-01 : f32
    %459 = vector.broadcast %cst_81 : f32 to vector<2x16xf32>
    %460 = arith.addf %458, %459 : vector<2x16xf32>
    %461 = math.tanh %453 : vector<2x16xf32>
    %462 = vector.extract_strided_slice %460 {offsets = [0, 0], sizes = [2, 4], strides = [1, 1]} : vector<2x16xf32> to vector<2x4xf32>
    %463 = vector.extract_strided_slice %460 {offsets = [0, 4], sizes = [2, 4], strides = [1, 1]} : vector<2x16xf32> to vector<2x4xf32>
    %464 = vector.extract_strided_slice %461 {offsets = [0, 8], sizes = [2, 4], strides = [1, 1]} : vector<2x16xf32> to vector<2x4xf32>
    %465 = vector.extract_strided_slice %460 {offsets = [0, 12], sizes = [2, 4], strides = [1, 1]} : vector<2x16xf32> to vector<2x4xf32>
    %466 = arith.mulf %463, %430 : vector<2x4xf32>
    %467 = arith.mulf %462, %464 : vector<2x4xf32>
    %468 = arith.addf %466, %467 : vector<2x4xf32>
    %469 = math.tanh %468 : vector<2x4xf32>
    %470 = arith.mulf %465, %469 : vector<2x4xf32>
    %c2 = arith.constant 2 : index
    %c0_82 = arith.constant 0 : index
    %471 = vector.load %arg8[%c2, %c0_82] : memref<16x4xf32, #tpu.memory_space<vmem>>, vector<2x4xf32>
    tpu.vector_store %arg8[%c2, %c0_82], %470 {strides = array<i32>} : memref<16x4xf32, #tpu.memory_space<vmem>>, vector<2x4xf32>,
    return
  }
}

</mosaic_0001>

<llo_original>
// kernel: tpu_custom_call.1
$region0: #{tpu_custom_call.1}
  #allocation0 [shape = 'u32[]', space=smem, size = 0x4, offset = 0x4, fixed_abs, tag = 'smem constant byte address 0x4 - core index']
  #allocation1 [shape = 'u32[144,128]{1,0:T(1,128)}', space=vmem, size = 0x12000, scoped, tag = 'internal scratch']
  %s0 = inlined_call_operand.vmem [shape: bf16[16,4], index: 0, kind: input, shape index: {}]
  %s1 = inlined_call_operand.vmem [shape: bf16[4,128], index: 1, kind: input, shape index: {}]
  %s2 = inlined_call_operand.vmem [shape: bf16[32,128], index: 2, kind: input, shape index: {}]
  %s3 = inlined_call_operand.vmem [shape: f32[1,128], index: 3, kind: input, shape index: {}]
  %s4 = inlined_call_operand.vmem [shape: bf16[32,16], index: 4, kind: input, shape index: {}]
  %s5 = inlined_call_operand.vmem [shape: f32[1,16], index: 5, kind: input, shape index: {}]
  %s6 = inlined_call_operand.vmem [shape: f32[4,16], index: 6, kind: input, shape index: {}]
  %s7 = inlined_call_operand.vmem [shape: f32[1,16], index: 7, kind: input, shape index: {}]
  %s8 = inlined_call_operand.vmem [shape: f32[16,4], index: 8, kind: output, shape index: {}]
  %s9 = sld [smem:[#allocation0]]
  $region42: #{tpu_custom_call.1} parent=0
    _
  %s11 = ssub.s32 1, %s9
  %s12 = scalar_select 0, %s11, %s9
  // Predicated region
  $region2: #{tpu_custom_call.1} parent=0 // pred_check
    _
  $region3: #{tpu_custom_call.1} parent=0 // pred_check_branch
    %14 = sbr.rel (0) target = $region5
  $region4: #{tpu_custom_call.1} parent=0 // pred_region
    _
  $region5: #{tpu_custom_call.1} parent=0 // pred_fallthru
    _
  // Predicated region
  $region6: #{tpu_custom_call.1} parent=0 // pred_check
    _
  $region7: #{tpu_custom_call.1} parent=0 // pred_check_branch
    %16 = sbr.rel (0) target = $region9
  $region8: #{tpu_custom_call.1} parent=0 // pred_region
    _
  $region9: #{tpu_custom_call.1} parent=0 // pred_fallthru
    _
  // Predicated region
  $region10: #{tpu_custom_call.1} parent=0 // pred_check
    _
  $region11: #{tpu_custom_call.1} parent=0 // pred_check_branch
    %18 = sbr.rel (0) target = $region13
  $region12: #{tpu_custom_call.1} parent=0 // pred_region
    _
  $region13: #{tpu_custom_call.1} parent=0 // pred_fallthru
    _
  // Predicated region
  $region14: #{tpu_custom_call.1} parent=0 // pred_check
    _
  $region15: #{tpu_custom_call.1} parent=0 // pred_check_branch
    %20 = sbr.rel (0) target = $region17
  $region16: #{tpu_custom_call.1} parent=0 // pred_region
    _
  $region17: #{tpu_custom_call.1} parent=0 // pred_fallthru
    _
  // Predicated region
  $region18: #{tpu_custom_call.1} parent=0 // pred_check
    _
  $region19: #{tpu_custom_call.1} parent=0 // pred_check_branch
    %22 = sbr.rel (0) target = $region21
  $region20: #{tpu_custom_call.1} parent=0 // pred_region
    _
  $region21: #{tpu_custom_call.1} parent=0 // pred_fallthru
    _
  // Predicated region
  $region22: #{tpu_custom_call.1} parent=0 // pred_check
    _
  $region23: #{tpu_custom_call.1} parent=0 // pred_check_branch
    %24 = sbr.rel (0) target = $region25
  $region24: #{tpu_custom_call.1} parent=0 // pred_region
    _
  $region25: #{tpu_custom_call.1} parent=0 // pred_fallthru
    _
  // Predicated region
  $region26: #{tpu_custom_call.1} parent=0 // pred_check
    _
  $region27: #{tpu_custom_call.1} parent=0 // pred_check_branch
    %26 = sbr.rel (0) target = $region29
  $region28: #{tpu_custom_call.1} parent=0 // pred_region
    _
  $region29: #{tpu_custom_call.1} parent=0 // pred_fallthru
    _
  // Predicated region
  $region30: #{tpu_custom_call.1} parent=0 // pred_check
    _
  $region31: #{tpu_custom_call.1} parent=0 // pred_check_branch
    %28 = sbr.rel (0) target = $region33
  $region32: #{tpu_custom_call.1} parent=0 // pred_region
    _
  $region33: #{tpu_custom_call.1} parent=0 // pred_fallthru
    _
  %v30 = vld [vmem:[%s2] sm:$0xf]
  %v31 = vld [vmem:[%s2 + $0x4] sm:$0xf]
  %v32 = vld [vmem:[%s2 + $0x8] sm:$0xf]
  %v33 = vld [vmem:[%s2 + $0xc] sm:$0xf]
  %v34 = vld [vmem:[%s4] sm:$0xf]
  %v35 = vld [vmem:[%s4 + $0x4] sm:$0xf]
  %v36 = vld [vmem:[%s4 + $0x8] sm:$0xf]
  %v37 = vld [vmem:[%s4 + $0xc] sm:$0xf]
  %v38 = vld [vmem:[%s6] sm:$0xf]
  %v39 = vld [vmem:[%s0] sm:$0xf]
  %v40 = vld [vmem:[%s0 + $0x4] sm:$0xf]
  %v41 = vld [vmem:[%s1] sm:$0x3]
  %v42 = vld [vmem:[%s3] sm:$0x1]
  %v44 = vlaneseq
  %v45 = vshrl.u32 %v44, 7
  %v46 = vsub.s32 0, %v45
  %v47 = vrot.slane %v42, %v46
  %v51 = vunpack.c.l.b16 %v39
  %v52 = vunpack.c.l.b16 %v40
  %v53 = vpack.c.b16 %v52, %v51
  %vm54 = vcmask 31744
  %v56 = vsel %vm54, %v53, 0
  %vm58 = vcmask 1041408
  %v60 = vsel %vm58, %v41, 0
  %62 = vmatprep.subr.bf16.mxu0 0
  %63 = vmatpush1.bf16.msra.mxu0 0
  %64 = vmatprep.subr.bf16.mxu0 0
  %65 = vmatpush1.bf16.msra.mxu0 0
  %66 = vmatprep.subr.bf16.mxu0 0
  %67 = vmatpush1.bf16.msra.mxu0 0
  %68 = vmatprep.subr.bf16.mxu0 0
  %69 = vmatpush1.bf16.msra.mxu0 0
  %70 = vmatprep.subr.bf16.mxu0 0
  %71 = vmatpush1.bf16.msra.mxu0 0
  %72 = vmatprep.subr.bf16.mxu0 0
  %73 = vmatpush1.bf16.msra.mxu0 0
  %74 = vmatprep.subr.bf16.mxu0 0
  %75 = vmatpush1.bf16.msra.mxu0 0
  %76 = vmatprep.subr.bf16.mxu0 0
  %77 = vmatpush1.bf16.msra.mxu0 %v60
  %78 = vmatprep.subr.bf16.mxu0 0
  %79 = vmatpush2.bf16.msra.mxu0 0
  %80 = vmatprep.subr.bf16.mxu0 0
  %81 = vmatpush2.bf16.msra.mxu0 0
  %82 = vmatprep.subr.bf16.mxu0 0
  %83 = vmatpush2.bf16.msra.mxu0 0
  %84 = vmatprep.subr.bf16.mxu0 0
  %85 = vmatpush2.bf16.msra.mxu0 0
  %86 = vmatprep.subr.bf16.mxu0 0
  %87 = vmatpush2.bf16.msra.mxu0 0
  %88 = vmatprep.subr.bf16.mxu0 0
  %89 = vmatpush2.bf16.msra.mxu0 0
  %90 = vmatprep.subr.bf16.mxu0 0
  %91 = vmatpush2.bf16.msra.mxu0 0
  %92 = vmatprep.subr.bf16.mxu0 0
  %93 = vmatpush2.bf16.msra.mxu0 0
  %94 = vmatprep.mubr.bf16.mxu0 0
  %95 = vmatmul.mubr.bf16.gmra.mxu0 %v56
  %v96 = vpop.f32.mrf.mxu0
  %v97 = vadd.f32 %v47, %v96
  %v98 = vpop.f32.mrf.mxu0
  %v99 = vpop.f32.mrf.mxu0
  %v100 = vadd.f32 %v47, %v99
  %v101 = vpop.f32.mrf.mxu0
  %102 = vdwg.mxu0
  %v107 = vunpack.c.l.b16 %v30
  %v108 = vunpack.c.l.b16 %v31
  %v109 = vunpack.c.l.b16 %v32
  %v110 = vunpack.c.l.b16 %v33
  %v111 = vpack.c.b16 %v108, %v107
  %v112 = vpack.c.b16 %v110, %v109
  %vm115 = vcmask 261120
  %v117 = vsel %vm115, 0, 0
  %119 = vmatprep.subr.bf16.mxu0 0
  %120 = vmatpush1.bf16.msra.mxu0 0
  %121 = vmatprep.subr.bf16.mxu0 0
  %122 = vmatpush1.bf16.msra.mxu0 0
  %123 = vmatprep.subr.bf16.mxu0 0
  %124 = vmatpush1.bf16.msra.mxu0 0
  %125 = vmatprep.subr.bf16.mxu0 0
  %126 = vmatpush1.bf16.msra.mxu0 0
  %127 = vmatprep.subr.bf16.mxu0 0
  %128 = vmatpush1.bf16.msra.mxu0 0
  %129 = vmatprep.subr.bf16.mxu0 0
  %130 = vmatpush1.bf16.msra.mxu0 0
  %131 = vmatprep.subr.bf16.mxu0 0
  %132 = vmatpush1.bf16.msra.mxu0 %v112
  %133 = vmatprep.subr.bf16.mxu0 0
  %134 = vmatpush1.bf16.msra.mxu0 %v111
  %135 = vmatprep.subr.bf16.mxu0 0
  %136 = vmatpush2.bf16.msra.mxu0 0
  %137 = vmatprep.subr.bf16.mxu0 0
  %138 = vmatpush2.bf16.msra.mxu0 0
  %139 = vmatprep.subr.bf16.mxu0 0
  %140 = vmatpush2.bf16.msra.mxu0 0
  %141 = vmatprep.subr.bf16.mxu0 0
  %142 = vmatpush2.bf16.msra.mxu0 0
  %143 = vmatprep.subr.bf16.mxu0 0
  %144 = vmatpush2.bf16.msra.mxu0 0
  %145 = vmatprep.subr.bf16.mxu0 0
  %146 = vmatpush2.bf16.msra.mxu0 0
  %147 = vmatprep.subr.bf16.mxu0 0
  %148 = vmatpush2.bf16.msra.mxu0 0
  %149 = vmatprep.subr.bf16.mxu0 0
  %150 = vmatpush2.bf16.msra.mxu0 0
  %151 = vmatprep.mubr.bf16.mxu0 0
  %152 = vmatmul.mubr.bf16.gmra.mxu0 %v117
  %v153 = vpop.f32.mrf.mxu0
  %v154 = vadd.f32 0.0, %v153
  %v155 = vpop.f32.mrf.mxu0
  %v156 = vpop.f32.mrf.mxu0
  %v157 = vpop.f32.mrf.mxu0
  %158 = vdwg.mxu0
  %v159 = vadd.f32 %v97, %v154
  %v160 = vmul.f32 %v159, 0.5
  %v161 = vtanh.pop %v160
  %v162 = vmul.f32 %v161, 0.5
  %v163 = vadd.f32 %v162, 0.5
  %v164 = vtanh.pop %v159
  %v165 = vmul.f32 %v163, 0.0
  %167 = vrot.lane.b32.xlu0 %v164, 64
  %v168 = vpop.permute.xlu0 %167
  %v170 = vmul.f32 %v163, %v168
  %172 = vrot.lane.b32.xlu0 %v170, 32
  %v173 = vpop.permute.xlu0 %172
  %v175 = vadd.f32 %v165, %v173
  %v176 = vtanh.pop %v175
  %178 = vrot.lane.b32.xlu0 %v176, 64
  %v179 = vpop.permute.xlu0 %178
  %v181 = vmul.f32 %v163, %v179
  %v182 = vpack.c.bf16 %v181, %v181
  %184 = vrot.lane.b32.xlu0 %v182, 32
  %v185 = vpop.permute.xlu0 %184
  %v187 = vsel %vm115, %v185, 0
  %189 = vmatprep.subr.bf16.mxu0 0
  %190 = vmatpush1.bf16.msra.mxu0 0
  %191 = vmatprep.subr.bf16.mxu0 0
  %192 = vmatpush1.bf16.msra.mxu0 0
  %193 = vmatprep.subr.bf16.mxu0 0
  %194 = vmatpush1.bf16.msra.mxu0 0
  %195 = vmatprep.subr.bf16.mxu0 0
  %196 = vmatpush1.bf16.msra.mxu0 0
  %197 = vmatprep.subr.bf16.mxu0 0
  %198 = vmatpush1.bf16.msra.mxu0 0
  %199 = vmatprep.subr.bf16.mxu0 0
  %200 = vmatpush1.bf16.msra.mxu0 0
  %201 = vmatprep.subr.bf16.mxu0 0
  %202 = vmatpush1.bf16.msra.mxu0 %v112
  %203 = vmatprep.subr.bf16.mxu0 0
  %204 = vmatpush1.bf16.msra.mxu0 %v111
  %205 = vmatprep.subr.bf16.mxu0 0
  %206 = vmatpush2.bf16.msra.mxu0 0
  %207 = vmatprep.subr.bf16.mxu0 0
  %208 = vmatpush2.bf16.msra.mxu0 0
  %209 = vmatprep.subr.bf16.mxu0 0
  %210 = vmatpush2.bf16.msra.mxu0 0
  %211 = vmatprep.subr.bf16.mxu0 0
  %212 = vmatpush2.bf16.msra.mxu0 0
  %213 = vmatprep.subr.bf16.mxu0 0
  %214 = vmatpush2.bf16.msra.mxu0 0
  %215 = vmatprep.subr.bf16.mxu0 0
  %216 = vmatpush2.bf16.msra.mxu0 0
  %217 = vmatprep.subr.bf16.mxu0 0
  %218 = vmatpush2.bf16.msra.mxu0 0
  %219 = vmatprep.subr.bf16.mxu0 0
  %220 = vmatpush2.bf16.msra.mxu0 0
  %221 = vmatprep.mubr.bf16.mxu0 0
  %222 = vmatmul.mubr.bf16.gmra.mxu0 %v187
  %v223 = vpop.f32.mrf.mxu0
  %v224 = vadd.f32 0.0, %v223
  %v225 = vpop.f32.mrf.mxu0
  %v226 = vpop.f32.mrf.mxu0
  %v227 = vpop.f32.mrf.mxu0
  %228 = vdwg.mxu0
  %v230 = vrot.slane %v224, 6
  %v232 = vadd.f32 %v97, %v230
  %v233 = vmul.f32 %v232, 0.5
  %v234 = vtanh.pop %v233
  %v235 = vmul.f32 %v234, 0.5
  %v236 = vadd.f32 %v235, 0.5
  %v237 = vtanh.pop %v232
  %v239 = vrot.slane %v175, 6
  %v241 = vmul.f32 %v236, %v239
  %243 = vrot.lane.b32.xlu0 %v237, 64
  %v244 = vpop.permute.xlu0 %243
  %v246 = vmul.f32 %v236, %v244
  %248 = vrot.lane.b32.xlu0 %v246, 32
  %v249 = vpop.permute.xlu0 %248
  %v251 = vadd.f32 %v241, %v249
  %v252 = vtanh.pop %v251
  %254 = vrot.lane.b32.xlu0 %v252, 64
  %v255 = vpop.permute.xlu0 %254
  %v257 = vmul.f32 %v236, %v255
  %v258 = vpack.c.bf16 %v257, %v257
  %v260 = vrot.slane %v258, 1
  %261 = vrot.lane.b32.xlu0 %v260, 32
  %v262 = vpop.permute.xlu0 %261
  %v264 = vsel %vm115, %v262, 0
  %266 = vmatprep.subr.bf16.mxu0 0
  %267 = vmatpush1.bf16.msra.mxu0 0
  %268 = vmatprep.subr.bf16.mxu0 0
  %269 = vmatpush1.bf16.msra.mxu0 0
  %270 = vmatprep.subr.bf16.mxu0 0
  %271 = vmatpush1.bf16.msra.mxu0 0
  %272 = vmatprep.subr.bf16.mxu0 0
  %273 = vmatpush1.bf16.msra.mxu0 0
  %274 = vmatprep.subr.bf16.mxu0 0
  %275 = vmatpush1.bf16.msra.mxu0 0
  %276 = vmatprep.subr.bf16.mxu0 0
  %277 = vmatpush1.bf16.msra.mxu0 0
  %278 = vmatprep.subr.bf16.mxu0 0
  %279 = vmatpush1.bf16.msra.mxu0 %v112
  %280 = vmatprep.subr.bf16.mxu0 0
  %281 = vmatpush1.bf16.msra.mxu0 %v111
  %282 = vmatprep.subr.bf16.mxu0 0
  %283 = vmatpush2.bf16.msra.mxu0 0
  %284 = vmatprep.subr.bf16.mxu0 0
  %285 = vmatpush2.bf16.msra.mxu0 0
  %286 = vmatprep.subr.bf16.mxu0 0
  %287 = vmatpush2.bf16.msra.mxu0 0
  %288 = vmatprep.subr.bf16.mxu0 0
  %289 = vmatpush2.bf16.msra.mxu0 0
  %290 = vmatprep.subr.bf16.mxu0 0
  %291 = vmatpush2.bf16.msra.mxu0 0
  %292 = vmatprep.subr.bf16.mxu0 0
  %293 = vmatpush2.bf16.msra.mxu0 0
  %294 = vmatprep.subr.bf16.mxu0 0
  %295 = vmatpush2.bf16.msra.mxu0 0
  %296 = vmatprep.subr.bf16.mxu0 0
  %297 = vmatpush2.bf16.msra.mxu0 0
  %298 = vmatprep.mubr.bf16.mxu0 0
  %299 = vmatmul.mubr.bf16.gmra.mxu0 %v264
  %v300 = vpop.f32.mrf.mxu0
  %v301 = vadd.f32 0.0, %v300
  %v302 = vpop.f32.mrf.mxu0
  %v303 = vpop.f32.mrf.mxu0
  %v304 = vpop.f32.mrf.mxu0
  %305 = vdwg.mxu0
  %v307 = vrot.slane %v301, 4
  %v309 = vadd.f32 %v97, %v307
  %v310 = vmul.f32 %v309, 0.5
  %v311 = vtanh.pop %v310
  %v312 = vmul.f32 %v311, 0.5
  %v313 = vadd.f32 %v312, 0.5
  %v314 = vtanh.pop %v309
  %v316 = vrot.slane %v251, 6
  %v318 = vmul.f32 %v313, %v316
  %320 = vrot.lane.b32.xlu0 %v314, 64
  %v321 = vpop.permute.xlu0 %320
  %v323 = vmul.f32 %v313, %v321
  %325 = vrot.lane.b32.xlu0 %v323, 32
  %v326 = vpop.permute.xlu0 %325
  %v328 = vadd.f32 %v318, %v326
  %v329 = vtanh.pop %v328
  %331 = vrot.lane.b32.xlu0 %v329, 64
  %v332 = vpop.permute.xlu0 %331
  %v334 = vmul.f32 %v313, %v332
  %v335 = vpack.c.bf16 %v334, %v334
  %v337 = vrot.slane %v335, 2
  %338 = vrot.lane.b32.xlu0 %v337, 32
  %v339 = vpop.permute.xlu0 %338
  %v341 = vsel %vm115, %v339, 0
  %343 = vmatprep.subr.bf16.mxu0 0
  %344 = vmatpush1.bf16.msra.mxu0 0
  %345 = vmatprep.subr.bf16.mxu0 0
  %346 = vmatpush1.bf16.msra.mxu0 0
  %347 = vmatprep.subr.bf16.mxu0 0
  %348 = vmatpush1.bf16.msra.mxu0 0
  %349 = vmatprep.subr.bf16.mxu0 0
  %350 = vmatpush1.bf16.msra.mxu0 0
  %351 = vmatprep.subr.bf16.mxu0 0
  %352 = vmatpush1.bf16.msra.mxu0 0
  %353 = vmatprep.subr.bf16.mxu0 0
  %354 = vmatpush1.bf16.msra.mxu0 0
  %355 = vmatprep.subr.bf16.mxu0 0
  %356 = vmatpush1.bf16.msra.mxu0 %v112
  %357 = vmatprep.subr.bf16.mxu0 0
  %358 = vmatpush1.bf16.msra.mxu0 %v111
  %359 = vmatprep.subr.bf16.mxu0 0
  %360 = vmatpush2.bf16.msra.mxu0 0
  %361 = vmatprep.subr.bf16.mxu0 0
  %362 = vmatpush2.bf16.msra.mxu0 0
  %363 = vmatprep.subr.bf16.mxu0 0
  %364 = vmatpush2.bf16.msra.mxu0 0
  %365 = vmatprep.subr.bf16.mxu0 0
  %366 = vmatpush2.bf16.msra.mxu0 0
  %367 = vmatprep.subr.bf16.mxu0 0
  %368 = vmatpush2.bf16.msra.mxu0 0
  %369 = vmatprep.subr.bf16.mxu0 0
  %370 = vmatpush2.bf16.msra.mxu0 0
  %371 = vmatprep.subr.bf16.mxu0 0
  %372 = vmatpush2.bf16.msra.mxu0 0
  %373 = vmatprep.subr.bf16.mxu0 0
  %374 = vmatpush2.bf16.msra.mxu0 0
  %375 = vmatprep.mubr.bf16.mxu0 0
  %376 = vmatmul.mubr.bf16.gmra.mxu0 %v341
  %v377 = vpop.f32.mrf.mxu0
  %v378 = vadd.f32 0.0, %v377
  %v379 = vpop.f32.mrf.mxu0
  %v380 = vpop.f32.mrf.mxu0
  %v381 = vpop.f32.mrf.mxu0
  %382 = vdwg.mxu0
  %v384 = vrot.slane %v378, 2
  %v386 = vadd.f32 %v97, %v384
  %v387 = vmul.f32 %v386, 0.5
  %v388 = vtanh.pop %v387
  %v389 = vmul.f32 %v388, 0.5
  %v390 = vadd.f32 %v389, 0.5
  %v391 = vtanh.pop %v386
  %v393 = vrot.slane %v328, 6
  %v395 = vmul.f32 %v390, %v393
  %397 = vrot.lane.b32.xlu0 %v391, 64
  %v398 = vpop.permute.xlu0 %397
  %v400 = vmul.f32 %v390, %v398
  %402 = vrot.lane.b32.xlu0 %v400, 32
  %v403 = vpop.permute.xlu0 %402
  %v405 = vadd.f32 %v395, %v403
  %v406 = vtanh.pop %v405
  %408 = vrot.lane.b32.xlu0 %v406, 64
  %v409 = vpop.permute.xlu0 %408
  %v411 = vmul.f32 %v390, %v409
  %v412 = vpack.c.bf16 %v411, %v411
  %v414 = vrot.slane %v412, 3
  %415 = vrot.lane.b32.xlu0 %v414, 32
  %v416 = vpop.permute.xlu0 %415
  %v418 = vsel %vm115, %v416, 0
  %420 = vmatprep.subr.bf16.mxu0 0
  %421 = vmatpush1.bf16.msra.mxu0 0
  %422 = vmatprep.subr.bf16.mxu0 0
  %423 = vmatpush1.bf16.msra.mxu0 0
  %424 = vmatprep.subr.bf16.mxu0 0
  %425 = vmatpush1.bf16.msra.mxu0 0
  %426 = vmatprep.subr.bf16.mxu0 0
  %427 = vmatpush1.bf16.msra.mxu0 0
  %428 = vmatprep.subr.bf16.mxu0 0
  %429 = vmatpush1.bf16.msra.mxu0 0
  %430 = vmatprep.subr.bf16.mxu0 0
  %431 = vmatpush1.bf16.msra.mxu0 0
  %432 = vmatprep.subr.bf16.mxu0 0
  %433 = vmatpush1.bf16.msra.mxu0 %v112
  %434 = vmatprep.subr.bf16.mxu0 0
  %435 = vmatpush1.bf16.msra.mxu0 %v111
  %436 = vmatprep.subr.bf16.mxu0 0
  %437 = vmatpush2.bf16.msra.mxu0 0
  %438 = vmatprep.subr.bf16.mxu0 0
  %439 = vmatpush2.bf16.msra.mxu0 0
  %440 = vmatprep.subr.bf16.mxu0 0
  %441 = vmatpush2.bf16.msra.mxu0 0
  %442 = vmatprep.subr.bf16.mxu0 0
  %443 = vmatpush2.bf16.msra.mxu0 0
  %444 = vmatprep.subr.bf16.mxu0 0
  %445 = vmatpush2.bf16.msra.mxu0 0
  %446 = vmatprep.subr.bf16.mxu0 0
  %447 = vmatpush2.bf16.msra.mxu0 0
  %448 = vmatprep.subr.bf16.mxu0 0
  %449 = vmatpush2.bf16.msra.mxu0 0
  %450 = vmatprep.subr.bf16.mxu0 0
  %451 = vmatpush2.bf16.msra.mxu0 0
  %452 = vmatprep.mubr.bf16.mxu0 0
  %453 = vmatmul.mubr.bf16.gmra.mxu0 %v418
  %v454 = vpop.f32.mrf.mxu0
  %v455 = vadd.f32 0.0, %v454
  %v456 = vpop.f32.mrf.mxu0
  %v457 = vpop.f32.mrf.mxu0
  %v458 = vpop.f32.mrf.mxu0
  %459 = vdwg.mxu0
  %v460 = vadd.f32 %v100, %v455
  %v461 = vmul.f32 %v460, 0.5
  %v462 = vtanh.pop %v461
  %v463 = vmul.f32 %v462, 0.5
  %v464 = vadd.f32 %v463, 0.5
  %v465 = vtanh.pop %v460
  %v467 = vrot.slane %v405, 6
  %v469 = vmul.f32 %v464, %v467
  %471 = vrot.lane.b32.xlu0 %v465, 64
  %v472 = vpop.permute.xlu0 %471
  %v474 = vmul.f32 %v464, %v472
  %476 = vrot.lane.b32.xlu0 %v474, 32
  %v477 = vpop.permute.xlu0 %476
  %v479 = vadd.f32 %v469, %v477
  %v480 = vtanh.pop %v479
  %482 = vrot.lane.b32.xlu0 %v480, 64
  %v483 = vpop.permute.xlu0 %482
  %v485 = vmul.f32 %v464, %v483
  %v486 = vpack.c.bf16 %v485, %v485
  %488 = vrot.lane.b32.xlu0 %v486, 32
  %v489 = vpop.permute.xlu0 %488
  %v491 = vsel %vm115, %v489, 0
  %493 = vmatprep.subr.bf16.mxu0 0
  %494 = vmatpush1.bf16.msra.mxu0 0
  %495 = vmatprep.subr.bf16.mxu0 0
  %496 = vmatpush1.bf16.msra.mxu0 0
  %497 = vmatprep.subr.bf16.mxu0 0
  %498 = vmatpush1.bf16.msra.mxu0 0
  %499 = vmatprep.subr.bf16.mxu0 0
  %500 = vmatpush1.bf16.msra.mxu0 0
  %501 = vmatprep.subr.bf16.mxu0 0
  %502 = vmatpush1.bf16.msra.mxu0 0
  %503 = vmatprep.subr.bf16.mxu0 0
  %504 = vmatpush1.bf16.msra.mxu0 0
  %505 = vmatprep.subr.bf16.mxu0 0
  %506 = vmatpush1.bf16.msra.mxu0 %v112
  %507 = vmatprep.subr.bf16.mxu0 0
  %508 = vmatpush1.bf16.msra.mxu0 %v111
  %509 = vmatprep.subr.bf16.mxu0 0
  %510 = vmatpush2.bf16.msra.mxu0 0
  %511 = vmatprep.subr.bf16.mxu0 0
  %512 = vmatpush2.bf16.msra.mxu0 0
  %513 = vmatprep.subr.bf16.mxu0 0
  %514 = vmatpush2.bf16.msra.mxu0 0
  %515 = vmatprep.subr.bf16.mxu0 0
  %516 = vmatpush2.bf16.msra.mxu0 0
  %517 = vmatprep.subr.bf16.mxu0 0
  %518 = vmatpush2.bf16.msra.mxu0 0
  %519 = vmatprep.subr.bf16.mxu0 0
  %520 = vmatpush2.bf16.msra.mxu0 0
  %521 = vmatprep.subr.bf16.mxu0 0
  %522 = vmatpush2.bf16.msra.mxu0 0
  %523 = vmatprep.subr.bf16.mxu0 0
  %524 = vmatpush2.bf16.msra.mxu0 0
  %525 = vmatprep.mubr.bf16.mxu0 0
  %526 = vmatmul.mubr.bf16.gmra.mxu0 %v491
  %v527 = vpop.f32.mrf.mxu0
  %v528 = vadd.f32 0.0, %v527
  %v529 = vpop.f32.mrf.mxu0
  %v530 = vpop.f32.mrf.mxu0
  %v531 = vpop.f32.mrf.mxu0
  %532 = vdwg.mxu0
  %v534 = vrot.slane %v528, 6
  %v536 = vadd.f32 %v100, %v534
  %v537 = vmul.f32 %v536, 0.5
  %v538 = vtanh.pop %v537
  %v539 = vmul.f32 %v538, 0.5
  %v540 = vadd.f32 %v539, 0.5
  %v541 = vtanh.pop %v536
  %v543 = vrot.slane %v479, 6
  %v545 = vmul.f32 %v540, %v543
  %547 = vrot.lane.b32.xlu0 %v541, 64
  %v548 = vpop.permute.xlu0 %547
  %v550 = vmul.f32 %v540, %v548
  %552 = vrot.lane.b32.xlu0 %v550, 32
  %v553 = vpop.permute.xlu0 %552
  %v555 = vadd.f32 %v545, %v553
  %v556 = vtanh.pop %v555
  %558 = vrot.lane.b32.xlu0 %v556, 64
  %v559 = vpop.permute.xlu0 %558
  %v561 = vmul.f32 %v540, %v559
  %v562 = vpack.c.bf16 %v561, %v561
  %v564 = vrot.slane %v562, 1
  %565 = vrot.lane.b32.xlu0 %v564, 32
  %v566 = vpop.permute.xlu0 %565
  %v568 = vsel %vm115, %v566, 0
  %570 = vmatprep.subr.bf16.mxu0 0
  %571 = vmatpush1.bf16.msra.mxu0 0
  %572 = vmatprep.subr.bf16.mxu0 0
  %573 = vmatpush1.bf16.msra.mxu0 0
  %574 = vmatprep.subr.bf16.mxu0 0
  %575 = vmatpush1.bf16.msra.mxu0 0
  %576 = vmatprep.subr.bf16.mxu0 0
  %577 = vmatpush1.bf16.msra.mxu0 0
  %578 = vmatprep.subr.bf16.mxu0 0
  %579 = vmatpush1.bf16.msra.mxu0 0
  %580 = vmatprep.subr.bf16.mxu0 0
  %581 = vmatpush1.bf16.msra.mxu0 0
  %582 = vmatprep.subr.bf16.mxu0 0
  %583 = vmatpush1.bf16.msra.mxu0 %v112
  %584 = vmatprep.subr.bf16.mxu0 0
  %585 = vmatpush1.bf16.msra.mxu0 %v111
  %586 = vmatprep.subr.bf16.mxu0 0
  %587 = vmatpush2.bf16.msra.mxu0 0
  %588 = vmatprep.subr.bf16.mxu0 0
  %589 = vmatpush2.bf16.msra.mxu0 0
  %590 = vmatprep.subr.bf16.mxu0 0
  %591 = vmatpush2.bf16.msra.mxu0 0
  %592 = vmatprep.subr.bf16.mxu0 0
  %593 = vmatpush2.bf16.msra.mxu0 0
  %594 = vmatprep.subr.bf16.mxu0 0
  %595 = vmatpush2.bf16.msra.mxu0 0
  %596 = vmatprep.subr.bf16.mxu0 0
  %597 = vmatpush2.bf16.msra.mxu0 0
  %598 = vmatprep.subr.bf16.mxu0 0
  %599 = vmatpush2.bf16.msra.mxu0 0
  %600 = vmatprep.subr.bf16.mxu0 0
  %601 = vmatpush2.bf16.msra.mxu0 0
  %602 = vmatprep.mubr.bf16.mxu0 0
  %603 = vmatmul.mubr.bf16.gmra.mxu0 %v568
  %v604 = vpop.f32.mrf.mxu0
  %v605 = vadd.f32 0.0, %v604
  %v606 = vpop.f32.mrf.mxu0
  %v607 = vpop.f32.mrf.mxu0
  %v608 = vpop.f32.mrf.mxu0
  %609 = vdwg.mxu0
  %v611 = vrot.slane %v605, 4
  %v613 = vadd.f32 %v100, %v611
  %v614 = vmul.f32 %v613, 0.5
  %v615 = vtanh.pop %v614
  %v616 = vmul.f32 %v615, 0.5
  %v617 = vadd.f32 %v616, 0.5
  %v618 = vtanh.pop %v613
  %v620 = vrot.slane %v555, 6
  %v622 = vmul.f32 %v617, %v620
  %624 = vrot.lane.b32.xlu0 %v618, 64
  %v625 = vpop.permute.xlu0 %624
  %v627 = vmul.f32 %v617, %v625
  %629 = vrot.lane.b32.xlu0 %v627, 32
  %v630 = vpop.permute.xlu0 %629
  %v632 = vadd.f32 %v622, %v630
  %v633 = vtanh.pop %v632
  %635 = vrot.lane.b32.xlu0 %v633, 64
  %v636 = vpop.permute.xlu0 %635
  %v638 = vmul.f32 %v617, %v636
  %v639 = vpack.c.bf16 %v638, %v638
  %v641 = vrot.slane %v639, 2
  %642 = vrot.lane.b32.xlu0 %v641, 32
  %v643 = vpop.permute.xlu0 %642
  %v645 = vsel %vm115, %v643, 0
  %647 = vmatprep.subr.bf16.mxu0 0
  %648 = vmatpush1.bf16.msra.mxu0 0
  %649 = vmatprep.subr.bf16.mxu0 0
  %650 = vmatpush1.bf16.msra.mxu0 0
  %651 = vmatprep.subr.bf16.mxu0 0
  %652 = vmatpush1.bf16.msra.mxu0 0
  %653 = vmatprep.subr.bf16.mxu0 0
  %654 = vmatpush1.bf16.msra.mxu0 0
  %655 = vmatprep.subr.bf16.mxu0 0
  %656 = vmatpush1.bf16.msra.mxu0 0
  %657 = vmatprep.subr.bf16.mxu0 0
  %658 = vmatpush1.bf16.msra.mxu0 0
  %659 = vmatprep.subr.bf16.mxu0 0
  %660 = vmatpush1.bf16.msra.mxu0 %v112
  %661 = vmatprep.subr.bf16.mxu0 0
  %662 = vmatpush1.bf16.msra.mxu0 %v111
  %663 = vmatprep.subr.bf16.mxu0 0
  %664 = vmatpush2.bf16.msra.mxu0 0
  %665 = vmatprep.subr.bf16.mxu0 0
  %666 = vmatpush2.bf16.msra.mxu0 0
  %667 = vmatprep.subr.bf16.mxu0 0
  %668 = vmatpush2.bf16.msra.mxu0 0
  %669 = vmatprep.subr.bf16.mxu0 0
  %670 = vmatpush2.bf16.msra.mxu0 0
  %671 = vmatprep.subr.bf16.mxu0 0
  %672 = vmatpush2.bf16.msra.mxu0 0
  %673 = vmatprep.subr.bf16.mxu0 0
  %674 = vmatpush2.bf16.msra.mxu0 0
  %675 = vmatprep.subr.bf16.mxu0 0
  %676 = vmatpush2.bf16.msra.mxu0 0
  %677 = vmatprep.subr.bf16.mxu0 0
  %678 = vmatpush2.bf16.msra.mxu0 0
  %679 = vmatprep.mubr.bf16.mxu0 0
  %680 = vmatmul.mubr.bf16.gmra.mxu0 %v645
  %v681 = vpop.f32.mrf.mxu0
  %v682 = vadd.f32 0.0, %v681
  %v683 = vpop.f32.mrf.mxu0
  %v684 = vpop.f32.mrf.mxu0
  %v685 = vpop.f32.mrf.mxu0
  %686 = vdwg.mxu0
  %v688 = vrot.slane %v682, 2
  %v690 = vadd.f32 %v100, %v688
  %v691 = vmul.f32 %v690, 0.5
  %v692 = vtanh.pop %v691
  %v693 = vmul.f32 %v692, 0.5
  %v694 = vadd.f32 %v693, 0.5
  %v695 = vtanh.pop %v690
  %v697 = vrot.slane %v632, 6
  %v699 = vmul.f32 %v694, %v697
  %701 = vrot.lane.b32.xlu0 %v695, 64
  %v702 = vpop.permute.xlu0 %701
  %v704 = vmul.f32 %v694, %v702
  %706 = vrot.lane.b32.xlu0 %v704, 32
  %v707 = vpop.permute.xlu0 %706
  %v709 = vadd.f32 %v699, %v707
  %v710 = vtanh.pop %v709
  %712 = vrot.lane.b32.xlu0 %v710, 64
  %v713 = vpop.permute.xlu0 %712
  %v715 = vmul.f32 %v694, %v713
  %v716 = vpack.c.bf16 %v715, %v715
  %v717 = vld [vmem:[%s5] sm:$0x1]
  %v719 = vlaneseq
  %v720 = vshrl.u32 %v719, 7
  %v721 = vsub.s32 0, %v720
  %v722 = vrot.slane %v717, %v721
  %v725 = vrot.slane %v716, 3
  %726 = vrot.lane.b32.xlu0 %v725, 32
  %v727 = vpop.permute.xlu0 %726
  %v732 = vunpack.c.l.b16 %v34
  %v733 = vunpack.c.l.b16 %v35
  %v734 = vunpack.c.l.b16 %v36
  %v735 = vunpack.c.l.b16 %v37
  %v736 = vpack.c.b16 %v733, %v732
  %v737 = vpack.c.b16 %v735, %v734
  %v741 = vsel %vm115, %v727, 0
  %743 = vmatprep.subr.bf16.mxu0 0
  %744 = vmatpush1.bf16.msra.mxu0 0
  %745 = vmatprep.subr.bf16.mxu0 0
  %746 = vmatpush1.bf16.msra.mxu0 0
  %747 = vmatprep.subr.bf16.mxu0 0
  %748 = vmatpush1.bf16.msra.mxu0 0
  %749 = vmatprep.subr.bf16.mxu0 0
  %750 = vmatpush1.bf16.msra.mxu0 0
  %751 = vmatprep.subr.bf16.mxu0 0
  %752 = vmatpush1.bf16.msra.mxu0 0
  %753 = vmatprep.subr.bf16.mxu0 0
  %754 = vmatpush1.bf16.msra.mxu0 0
  %755 = vmatprep.subr.bf16.mxu0 0
  %756 = vmatpush1.bf16.msra.mxu0 %v737
  %757 = vmatprep.subr.bf16.mxu0 0
  %758 = vmatpush1.bf16.msra.mxu0 %v736
  %759 = vmatprep.subr.bf16.mxu0 0
  %760 = vmatpush2.bf16.msra.mxu0 0
  %761 = vmatprep.subr.bf16.mxu0 0
  %762 = vmatpush2.bf16.msra.mxu0 0
  %763 = vmatprep.subr.bf16.mxu0 0
  %764 = vmatpush2.bf16.msra.mxu0 0
  %765 = vmatprep.subr.bf16.mxu0 0
  %766 = vmatpush2.bf16.msra.mxu0 0
  %767 = vmatprep.subr.bf16.mxu0 0
  %768 = vmatpush2.bf16.msra.mxu0 0
  %769 = vmatprep.subr.bf16.mxu0 0
  %770 = vmatpush2.bf16.msra.mxu0 0
  %771 = vmatprep.subr.bf16.mxu0 0
  %772 = vmatpush2.bf16.msra.mxu0 0
  %773 = vmatprep.subr.bf16.mxu0 0
  %774 = vmatpush2.bf16.msra.mxu0 0
  %775 = vmatprep.mubr.bf16.mxu0 0
  %776 = vmatmul.mubr.bf16.gmra.mxu0 %v741
  %v777 = vpop.f32.mrf.mxu0
  %v778 = vadd.f32 %v722, %v777
  %v779 = vpop.f32.mrf.mxu0
  %v780 = vpop.f32.mrf.mxu0
  %v781 = vpop.f32.mrf.mxu0
  %782 = vdwg.mxu0
  %v783 = vmul.f32 %v778, 0.5
  %v784 = vtanh.pop %v783
  %v785 = vmul.f32 %v784, 0.5
  %v786 = vadd.f32 %v785, 0.5
  %v787 = vtanh.pop %v778
  %789 = vrot.lane.b32.xlu0 %v787, 120
  %v790 = vpop.permute.xlu0 %789
  %v792 = vmul.f32 %v786, %v790
  %v793 = vtanh.pop %v792
  %795 = vrot.lane.b32.xlu0 %v793, 12
  %v796 = vpop.permute.xlu0 %795
  %v798 = vmul.f32 %v786, %v796
  %800 = vrot.lane.b32.xlu0 %v798, 116
  %v801 = vpop.permute.xlu0 %800
  %vm803 = vcmask 25600
  %804 = vst.msk [vmem:[%s8] sm:$0x3] %vm803, %v801
  %v805 = vld [vmem:[%s7] sm:$0x1]
  %v807 = vlaneseq
  %v808 = vshrl.u32 %v807, 7
  %v809 = vsub.s32 0, %v808
  %v810 = vrot.slane %v805, %v809
  %812 = vset.pattern.permute.xlu0 12
  %813 = vperm.xlu0 %812, %v798
  %v814 = vpop.permute.xlu0 %813
  %v816 = vlaneseq
  %v817 = vshrl.u32 %v816, 7
  %v818 = vsub.s32 0, %v817
  %v819 = vrot.slane %v38, %v818
  %v820 = vmul.f32 %v814, %v819
  %v821 = vadd.f32 %v810, %v820
  %822 = vset.pattern.permute.xlu0 13
  %823 = vperm.xlu0 %822, %v798
  %v824 = vpop.permute.xlu0 %823
  %v826 = vlaneseq
  %v827 = vshrl.u32 %v826, 7
  %v828 = vsub.s32 1, %v827
  %v829 = vrot.slane %v38, %v828
  %v830 = vmul.f32 %v824, %v829
  %v831 = vadd.f32 %v821, %v830
  %832 = vset.pattern.permute.xlu0 14
  %833 = vperm.xlu0 %832, %v798
  %v834 = vpop.permute.xlu0 %833
  %v836 = vlaneseq
  %v837 = vshrl.u32 %v836, 7
  %v838 = vsub.s32 2, %v837
  %v839 = vrot.slane %v38, %v838
  %v840 = vmul.f32 %v834, %v839
  %v841 = vadd.f32 %v831, %v840
  %842 = vset.pattern.permute.xlu0 15
  %843 = vperm.xlu0 %842, %v798
  %v844 = vpop.permute.xlu0 %843
  %v846 = vlaneseq
  %v847 = vshrl.u32 %v846, 7
  %v848 = vsub.s32 3, %v847
  %v849 = vrot.slane %v38, %v848
  %v850 = vmul.f32 %v844, %v849
  %v851 = vadd.f32 %v841, %v850
  %v852 = vmul.f32 %v851, 0.5
  %v853 = vtanh.pop %v852
  %v854 = vmul.f32 %v853, 0.5
  %v855 = vadd.f32 %v854, 0.5
  %v856 = vtanh.pop %v851
  %858 = vrot.lane.b32.xlu0 %v792, 4
  %v859 = vpop.permute.xlu0 %858
  %v861 = vmul.f32 %v855, %v859
  %863 = vrot.lane.b32.xlu0 %v856, 120
  %v864 = vpop.permute.xlu0 %863
  %v866 = vmul.f32 %v855, %v864
  %868 = vrot.lane.b32.xlu0 %v866, 4
  %v869 = vpop.permute.xlu0 %868
  %v871 = vadd.f32 %v861, %v869
  %v872 = vtanh.pop %v871
  %874 = vrot.lane.b32.xlu0 %v872, 8
  %v875 = vpop.permute.xlu0 %874
  %v877 = vmul.f32 %v855, %v875
  %879 = vrot.lane.b32.xlu0 %v877, 116
  %v880 = vpop.permute.xlu0 %879
  %882 = vst.msk [vmem:[%s8 + $0xe] sm:$0x3] %vm803, %v880
  %883 = vset.pattern.permute.xlu0 12
  %884 = vperm.xlu0 %883, %v877
  %v885 = vpop.permute.xlu0 %884
  %v887 = vmul.f32 %v885, %v819
  %v888 = vadd.f32 %v810, %v887
  %889 = vset.pattern.permute.xlu0 13
  %890 = vperm.xlu0 %889, %v877
  %v891 = vpop.permute.xlu0 %890
  %v893 = vmul.f32 %v891, %v829
  %v894 = vadd.f32 %v888, %v893
  %895 = vset.pattern.permute.xlu0 14
  %896 = vperm.xlu0 %895, %v877
  %v897 = vpop.permute.xlu0 %896
  %v899 = vmul.f32 %v897, %v839
  %v900 = vadd.f32 %v894, %v899
  %901 = vset.pattern.permute.xlu0 15
  %902 = vperm.xlu0 %901, %v877
  %v903 = vpop.permute.xlu0 %902
  %v905 = vmul.f32 %v903, %v849
  %v906 = vadd.f32 %v900, %v905
  %v907 = vmul.f32 %v906, 0.5
  %v908 = vtanh.pop %v907
  %v909 = vmul.f32 %v908, 0.5
  %v910 = vadd.f32 %v909, 0.5
  %v911 = vtanh.pop %v906
  %v912 = vmul.f32 %v910, %v871
  %914 = vrot.lane.b32.xlu0 %v911, 120
  %v915 = vpop.permute.xlu0 %914
  %v917 = vmul.f32 %v910, %v915
  %919 = vrot.lane.b32.xlu0 %v917, 4
  %v920 = vpop.permute.xlu0 %919
  %v922 = vadd.f32 %v912, %v920
  %v923 = vtanh.pop %v922
  %925 = vrot.lane.b32.xlu0 %v923, 8
  %v926 = vpop.permute.xlu0 %925
  %v928 = vmul.f32 %v910, %v926
  %930 = vrot.lane.b32.xlu0 %v928, 116
  %v931 = vpop.permute.xlu0 %930
  %933 = vst.msk [vmem:[%s8 + $0xc] sm:$0x3] %vm803, %v931
  %934 = vset.pattern.permute.xlu0 12
  %935 = vperm.xlu0 %934, %v928
  %v936 = vpop.permute.xlu0 %935
  %v938 = vmul.f32 %v936, %v819
  %v939 = vadd.f32 %v810, %v938
  %940 = vset.pattern.permute.xlu0 13
  %941 = vperm.xlu0 %940, %v928
  %v942 = vpop.permute.xlu0 %941
  %v944 = vmul.f32 %v942, %v829
  %v945 = vadd.f32 %v939, %v944
  %946 = vset.pattern.permute.xlu0 14
  %947 = vperm.xlu0 %946, %v928
  %v948 = vpop.permute.xlu0 %947
  %v950 = vmul.f32 %v948, %v839
  %v951 = vadd.f32 %v945, %v950
  %952 = vset.pattern.permute.xlu0 15
  %953 = vperm.xlu0 %952, %v928
  %v954 = vpop.permute.xlu0 %953
  %v956 = vmul.f32 %v954, %v849
  %v957 = vadd.f32 %v951, %v956
  %v958 = vmul.f32 %v957, 0.5
  %v959 = vtanh.pop %v958
  %v960 = vmul.f32 %v959, 0.5
  %v961 = vadd.f32 %v960, 0.5
  %v962 = vtanh.pop %v957
  %v963 = vmul.f32 %v961, %v922
  %965 = vrot.lane.b32.xlu0 %v962, 120
  %v966 = vpop.permute.xlu0 %965
  %v968 = vmul.f32 %v961, %v966
  %970 = vrot.lane.b32.xlu0 %v968, 4
  %v971 = vpop.permute.xlu0 %970
  %v973 = vadd.f32 %v963, %v971
  %v974 = vtanh.pop %v973
  %976 = vrot.lane.b32.xlu0 %v974, 8
  %v977 = vpop.permute.xlu0 %976
  %v979 = vmul.f32 %v961, %v977
  %981 = vrot.lane.b32.xlu0 %v979, 116
  %v982 = vpop.permute.xlu0 %981
  %984 = vst.msk [vmem:[%s8 + $0xa] sm:$0x3] %vm803, %v982
  %985 = vset.pattern.permute.xlu0 12
  %986 = vperm.xlu0 %985, %v979
  %v987 = vpop.permute.xlu0 %986
  %v989 = vmul.f32 %v987, %v819
  %v990 = vadd.f32 %v810, %v989
  %991 = vset.pattern.permute.xlu0 13
  %992 = vperm.xlu0 %991, %v979
  %v993 = vpop.permute.xlu0 %992
  %v995 = vmul.f32 %v993, %v829
  %v996 = vadd.f32 %v990, %v995
  %997 = vset.pattern.permute.xlu0 14
  %998 = vperm.xlu0 %997, %v979
  %v999 = vpop.permute.xlu0 %998
  %v1001 = vmul.f32 %v999, %v839
  %v1002 = vadd.f32 %v996, %v1001
  %1003 = vset.pattern.permute.xlu0 15
  %1004 = vperm.xlu0 %1003, %v979
  %v1005 = vpop.permute.xlu0 %1004
  %v1007 = vmul.f32 %v1005, %v849
  %v1008 = vadd.f32 %v1002, %v1007
  %v1009 = vmul.f32 %v1008, 0.5
  %v1010 = vtanh.pop %v1009
  %v1011 = vmul.f32 %v1010, 0.5
  %v1012 = vadd.f32 %v1011, 0.5
  %v1013 = vtanh.pop %v1008
  %v1014 = vmul.f32 %v1012, %v973
  %1016 = vrot.lane.b32.xlu0 %v1013, 120
  %v1017 = vpop.permute.xlu0 %1016
  %v1019 = vmul.f32 %v1012, %v1017
  %1021 = vrot.lane.b32.xlu0 %v1019, 4
  %v1022 = vpop.permute.xlu0 %1021
  %v1024 = vadd.f32 %v1014, %v1022
  %v1025 = vtanh.pop %v1024
  %1027 = vrot.lane.b32.xlu0 %v1025, 8
  %v1028 = vpop.permute.xlu0 %1027
  %v1030 = vmul.f32 %v1012, %v1028
  %1032 = vrot.lane.b32.xlu0 %v1030, 116
  %v1033 = vpop.permute.xlu0 %1032
  %1035 = vst.msk [vmem:[%s8 + $0x8] sm:$0x3] %vm803, %v1033
  %1036 = vset.pattern.permute.xlu0 12
  %1037 = vperm.xlu0 %1036, %v1030
  %v1038 = vpop.permute.xlu0 %1037
  %v1040 = vmul.f32 %v1038, %v819
  %v1041 = vadd.f32 %v810, %v1040
  %1042 = vset.pattern.permute.xlu0 13
  %1043 = vperm.xlu0 %1042, %v1030
  %v1044 = vpop.permute.xlu0 %1043
  %v1046 = vmul.f32 %v1044, %v829
  %v1047 = vadd.f32 %v1041, %v1046
  %1048 = vset.pattern.permute.xlu0 14
  %1049 = vperm.xlu0 %1048, %v1030
  %v1050 = vpop.permute.xlu0 %1049
  %v1052 = vmul.f32 %v1050, %v839
  %v1053 = vadd.f32 %v1047, %v1052
  %1054 = vset.pattern.permute.xlu0 15
  %1055 = vperm.xlu0 %1054, %v1030
  %v1056 = vpop.permute.xlu0 %1055
  %v1058 = vmul.f32 %v1056, %v849
  %v1059 = vadd.f32 %v1053, %v1058
  %v1060 = vmul.f32 %v1059, 0.5
  %v1061 = vtanh.pop %v1060
  %v1062 = vmul.f32 %v1061, 0.5
  %v1063 = vadd.f32 %v1062, 0.5
  %v1064 = vtanh.pop %v1059
  %v1065 = vmul.f32 %v1063, %v1024
  %1067 = vrot.lane.b32.xlu0 %v1064, 120
  %v1068 = vpop.permute.xlu0 %1067
  %v1070 = vmul.f32 %v1063, %v1068
  %1072 = vrot.lane.b32.xlu0 %v1070, 4
  %v1073 = vpop.permute.xlu0 %1072
  %v1075 = vadd.f32 %v1065, %v1073
  %v1076 = vtanh.pop %v1075
  %1078 = vrot.lane.b32.xlu0 %v1076, 8
  %v1079 = vpop.permute.xlu0 %1078
  %v1081 = vmul.f32 %v1063, %v1079
  %1083 = vrot.lane.b32.xlu0 %v1081, 116
  %v1084 = vpop.permute.xlu0 %1083
  %1086 = vst.msk [vmem:[%s8 + $0x6] sm:$0x3] %vm803, %v1084
  %1087 = vset.pattern.permute.xlu0 12
  %1088 = vperm.xlu0 %1087, %v1081
  %v1089 = vpop.permute.xlu0 %1088
  %v1091 = vmul.f32 %v1089, %v819
  %v1092 = vadd.f32 %v810, %v1091
  %1093 = vset.pattern.permute.xlu0 13
  %1094 = vperm.xlu0 %1093, %v1081
  %v1095 = vpop.permute.xlu0 %1094
  %v1097 = vmul.f32 %v1095, %v829
  %v1098 = vadd.f32 %v1092, %v1097
  %1099 = vset.pattern.permute.xlu0 14
  %1100 = vperm.xlu0 %1099, %v1081
  %v1101 = vpop.permute.xlu0 %1100
  %v1103 = vmul.f32 %v1101, %v839
  %v1104 = vadd.f32 %v1098, %v1103
  %1105 = vset.pattern.permute.xlu0 15
  %1106 = vperm.xlu0 %1105, %v1081
  %v1107 = vpop.permute.xlu0 %1106
  %v1109 = vmul.f32 %v1107, %v849
  %v1110 = vadd.f32 %v1104, %v1109
  %v1111 = vmul.f32 %v1110, 0.5
  %v1112 = vtanh.pop %v1111
  %v1113 = vmul.f32 %v1112, 0.5
  %v1114 = vadd.f32 %v1113, 0.5
  %v1115 = vtanh.pop %v1110
  %v1116 = vmul.f32 %v1114, %v1075
  %1118 = vrot.lane.b32.xlu0 %v1115, 120
  %v1119 = vpop.permute.xlu0 %1118
  %v1121 = vmul.f32 %v1114, %v1119
  %1123 = vrot.lane.b32.xlu0 %v1121, 4
  %v1124 = vpop.permute.xlu0 %1123
  %v1126 = vadd.f32 %v1116, %v1124
  %v1127 = vtanh.pop %v1126
  %1129 = vrot.lane.b32.xlu0 %v1127, 8
  %v1130 = vpop.permute.xlu0 %1129
  %v1132 = vmul.f32 %v1114, %v1130
  %1134 = vrot.lane.b32.xlu0 %v1132, 116
  %v1135 = vpop.permute.xlu0 %1134
  %1137 = vst.msk [vmem:[%s8 + $0x4] sm:$0x3] %vm803, %v1135
  %1138 = vset.pattern.permute.xlu0 12
  %1139 = vperm.xlu0 %1138, %v1132
  %v1140 = vpop.permute.xlu0 %1139
  %v1142 = vmul.f32 %v1140, %v819
  %v1143 = vadd.f32 %v810, %v1142
  %1144 = vset.pattern.permute.xlu0 13
  %1145 = vperm.xlu0 %1144, %v1132
  %v1146 = vpop.permute.xlu0 %1145
  %v1148 = vmul.f32 %v1146, %v829
  %v1149 = vadd.f32 %v1143, %v1148
  %1150 = vset.pattern.permute.xlu0 14
  %1151 = vperm.xlu0 %1150, %v1132
  %v1152 = vpop.permute.xlu0 %1151
  %v1154 = vmul.f32 %v1152, %v839
  %v1155 = vadd.f32 %v1149, %v1154
  %1156 = vset.pattern.permute.xlu0 15
  %1157 = vperm.xlu0 %1156, %v1132
  %v1158 = vpop.permute.xlu0 %1157
  %v1160 = vmul.f32 %v1158, %v849
  %v1161 = vadd.f32 %v1155, %v1160
  %v1162 = vmul.f32 %v1161, 0.5
  %v1163 = vtanh.pop %v1162
  %v1164 = vmul.f32 %v1163, 0.5
  %v1165 = vadd.f32 %v1164, 0.5
  %v1166 = vtanh.pop %v1161
  %v1167 = vmul.f32 %v1165, %v1126
  %1169 = vrot.lane.b32.xlu0 %v1166, 120
  %v1170 = vpop.permute.xlu0 %1169
  %v1172 = vmul.f32 %v1165, %v1170
  %1174 = vrot.lane.b32.xlu0 %v1172, 4
  %v1175 = vpop.permute.xlu0 %1174
  %v1177 = vadd.f32 %v1167, %v1175
  %v1178 = vtanh.pop %v1177
  %1180 = vrot.lane.b32.xlu0 %v1178, 8
  %v1181 = vpop.permute.xlu0 %1180
  %v1183 = vmul.f32 %v1165, %v1181
  %1185 = vrot.lane.b32.xlu0 %v1183, 116
  %v1186 = vpop.permute.xlu0 %1185
  %1188 = vst.msk [vmem:[%s8 + $0x2] sm:$0x3] %vm803, %v1186
  // Predicated region
  $region34: #{tpu_custom_call.1} parent=0 // pred_check
    _
  $region35: #{tpu_custom_call.1} parent=0 // pred_check_branch
    %1190 = sbr.rel (0) target = $region37
  $region36: #{tpu_custom_call.1} parent=0 // pred_region
    _
  $region37: #{tpu_custom_call.1} parent=0 // pred_fallthru
    _
  // Predicated region
  $region38: #{tpu_custom_call.1} parent=0 // pred_check
    _
  $region39: #{tpu_custom_call.1} parent=0 // pred_check_branch
    %1192 = sbr.rel (0) target = $region41
  $region40: #{tpu_custom_call.1} parent=0 // pred_region
    _
  $region41: #{tpu_custom_call.1} parent=0 // pred_fallthru
    _

</llo_original>
